<compile_context>
chip_gen: v7x
topology: tpu7x:2x2x1
jax: 0.10.0
libtpu: 0.0.40
codegen_flags: <defaults>
</compile_context>

<pallas_src>
import math
from functools import partial

import jax
import jax.numpy as jnp
import numpy as np
from jax import lax
from jax.experimental import pallas as pl
from jax.experimental.pallas import tpu as pltpu

LRELU_SLOPE = 0.1
MIN_Z_VAR = 1e-7
BETA_KL = 1.0
LIK_SCALE = 1.0
LOG_2PI = math.log(2.0 * math.pi)


def _round_up(n, m):
    return ((n + m - 1) // m) * m


def _lrelu(v):
    # max(v, a*v) == leaky_relu(v) for 0 < a < 1; 2 VPU ops instead of 3.
    return jnp.maximum(v, LRELU_SLOPE * v)


def _mm(w, x):
    # (Cout, Cin) @ (Cin, TILE_P) -- channel contraction per pixel, f32 acc.
    return jnp.dot(w, x, preferred_element_type=jnp.float32)


# --------------------------------------------------------- fused CVAE kernel
def cvae_kernel(data_ref, w_ref, b_ref,
                xmu_ref, ll_ref, kl_ref,
                kl_acc, ll_acc,
                *, Cx, Cy, Cz, Hq, Hp,
                tile, tiles_per_split, P, needs_mask, w_offs, b_offs):
    c = pl.program_id(0)          # parallel split (v7x megacore axis)
    i = pl.program_id(1)          # pixel tiles within this split (reduction)
    n_inner = pl.num_programs(1)

    @pl.when(i == 0)
    def _():
        kl_acc[...] = jnp.zeros_like(kl_acc)
        ll_acc[...] = jnp.zeros_like(ll_acc)

    RA = 2 * Hq + Hp
    oA, oB, oC, oD, oE1, oE2, oF = w_offs
    bAo, bBo, bCo, bDo, bEo, bFo = b_offs

    # VMEM-resident packed parameters: static 8-row-aligned sublane slices.
    wA = w_ref[oA:oA + RA, 0:Cx + Cy]          # block-diag [q_x_in; q_y_in; p_y_in]
    wB = w_ref[oB:oB + Hq, 0:2 * Hq]           # q_out trunk  [wq1x | wq1y]
    wC = w_ref[oC:oC + 2 * Cz, 0:Hq]           # stacked      [wq2mu; wq2lv]
    wD = w_ref[oD:oD + Hp, 0:Cz]               # p_z_in
    wE1 = w_ref[oE1:oE1 + Hp, 0:Hp]            # p_y_z_in (z half)
    wE2 = w_ref[oE2:oE2 + Hp, 0:Hp]            # p_y_z_in (y half)
    wF = w_ref[oF:oF + Cx, 0:Hp]               # p_mu_out
    bA = b_ref[bAo:bAo + RA, :]
    bB = b_ref[bBo:bBo + Hq, :]
    bC = b_ref[bCo:bCo + 2 * Cz, :]
    bD = b_ref[bDo:bDo + Hp, :]
    bE = b_ref[bEo:bEo + Hp, :]
    bF = b_ref[bFo:bFo + Cx, :]

    # Streaming data slab (8, tile): rows [x (Cx) | y (Cy) | eps (Cz) | pad].
    xy = data_ref[0:Cx + Cy, :]                               # [x; y]
    x = xy[0:Cx, :]
    eps = data_ref[Cx + Cy:Cx + Cy + Cz, :]

    # ----- Stage A: fused q_x_in / q_y_in / p_y_in (block-diagonal 1x1 convs)
    hA = _lrelu(_mm(wA, xy) + bA)                             # (2Hq+Hp, tile)
    hxy = hA[0:2 * Hq, :]                                     # [h_x; h_y]
    hy2 = hA[2 * Hq:RA, :]                                    # p_y_in(y)

    # ----- Stage B: q_out trunk on concat([h_x, h_y])
    h1 = _lrelu(_mm(wB, hxy) + bB)                            # (Hq, tile)

    # ----- Stage C: fused mu / log_var heads
    zs = _mm(wC, h1) + bC                                     # (2Cz, tile)
    z_mu = zs[0:Cz, :]
    z_lv = zs[Cz:2 * Cz, :]

    # Single exp: s = exp(log_var/2); exp(log_var) = s*s.
    s = jnp.exp(0.5 * z_lv)
    kl_terms = z_mu * z_mu + s * s - z_lv - 1.0               # (Cz, tile)
    z = z_mu + eps * (s + MIN_Z_VAR)                          # reparam (L = 1)

    # ----- Decoder P
    # TODO(synk): if a bundle dump shows MXU push/pop latency binding at these
    # tiny channel counts, re-target the 1x1 convs to VPU broadcast-MACs.
    hz = _lrelu(_mm(wD, z) + bD)
    h1p = _lrelu(_mm(wE1, hz) + _mm(wE2, hy2) + bE)
    xmu = _mm(wF, h1p) + bF                                   # (Cx, tile)
    xmu_ref[...] = xmu

    diff = x - xmu
    ll_terms = -0.5 * diff * diff                             # (Cx, tile)

    if needs_mask:
        start = (c * tiles_per_split + i) * tile
        lane = lax.broadcasted_iota(jnp.int32, (1, tile), 1)
        valid = (lane + start) < P
        kl_terms = jnp.where(valid, kl_terms, 0.0)
        ll_terms = jnp.where(valid, ll_terms, 0.0)

    # Lane-partial accumulators: plain vreg adds, no per-step cross-lane reduce.
    kl_acc[...] += kl_terms
    ll_acc[...] += ll_terms

    # ----- per-split finalize: single cross-lane reduction
    @pl.when(i == n_inner - 1)
    def _():
        kl_ref[...] = jnp.sum(kl_acc[...], keepdims=True).reshape(1, 1, 1)
        ll_ref[...] = jnp.sum(ll_acc[...], axis=1,
                              keepdims=True).reshape(1, Cx, 1)


# ------------------------------------------------------------------ packing
def nchw_to_cm(t):
    """NCHW -> channel-major (C, N*H*W) so the lane axis is the pixel axis."""
    n, ch, h, w = t.shape
    return jnp.transpose(t, (1, 0, 2, 3)).reshape(ch, n * h * w)


def pack_params(p, Cx, Cy, Cz, Hq, Hp):
    """Pack the 20 per-layer weights/biases into two small padded slabs."""
    RA = 2 * Hq + Hp
    wA = jnp.zeros((RA, Cx + Cy), jnp.float32)
    wA = wA.at[0:Hq, 0:Cx].set(p["wqx"])
    wA = wA.at[Hq:2 * Hq, Cx:Cx + Cy].set(p["wqy"])
    wA = wA.at[2 * Hq:RA, Cx:Cx + Cy].set(p["wpy"])
    bA = jnp.concatenate([p["bqx"], p["bqy"], p["bpy"]], axis=0)

    wB = jnp.concatenate([p["wq1x"], p["wq1y"]], axis=1)       # (Hq, 2Hq)
    wC = jnp.concatenate([p["wq2mu"], p["wq2lv"]], axis=0)     # (2Cz, Hq)
    bC = jnp.concatenate([p["bq2mu"], p["bq2lv"]], axis=0)

    w_list = [wA, wB, wC, p["wpz"], p["wp1z"], p["wp1y"], p["wmu"]]
    b_list = [bA, p["bq1"], bC, p["bpz"], p["bp1"], p["bmu"]]

    w_cols = max(w.shape[1] for w in w_list)
    w_offs, r = [], 0
    for w in w_list:
        w_offs.append(r)
        r = _round_up(r + w.shape[0], 8)       # 8-aligned sublane slice starts
    w_slab = jnp.zeros((r, w_cols), jnp.float32)
    for off, w in zip(w_offs, w_list):
        w_slab = w_slab.at[off:off + w.shape[0], 0:w.shape[1]].set(w)

    b_offs, r = [], 0
    for b in b_list:
        b_offs.append(r)
        r = _round_up(r + b.shape[0], 8)
    b_slab = jnp.zeros((r, 1), jnp.float32)
    for off, b in zip(b_offs, b_list):
        b_slab = b_slab.at[off:off + b.shape[0], :].set(b)

    return w_slab, b_slab, tuple(w_offs), tuple(b_offs)


# ------------------------------------------------------------------ wrapper
def cvae_forward(params, x, y, eps, *, tile_p=8192, n_splits=2):
    """Returns (ELBO, log_likelihood per x-feature, KL_term, x_mu channel-major)."""
    M, Cx, H, W = x.shape
    L, M2, Cz, _, _ = eps.shape          # L = 1 in this architecture
    Cy = y.shape[1]
    assert L == 1 and M2 == M
    Hq = params["wqx"].shape[0]
    Hp = params["wpz"].shape[0]
    P = M * H * W

    # Tile / grid sizing: big lane-dense tiles, cdiv grid, padded + masked tail.
    tile = min(_round_up(tile_p, 128), _round_up(P, 128))
    total_tiles = (P + tile - 1) // tile
    n_splits_eff = max(1, min(n_splits, total_tiles))        # v7x: 2 TCs
    tiles_per_split = (total_tiles + n_splits_eff - 1) // n_splits_eff
    P_pad = n_splits_eff * tiles_per_split * tile
    needs_mask = (P_pad != P)

    # --- single channel-major streaming slab: rows [x | y | eps | pad] ---
    # TODO(synk): on v6e/v7x store this slab as bf16 and upcast in-kernel
    # (keep f32 accumulation); not done here to keep an exact f32 reference.
    x_f = nchw_to_cm(x)
    y_f = nchw_to_cm(y)
    eps_f = nchw_to_cm(eps.reshape(L * M, Cz, H, W))
    n_rows = Cx + Cy + Cz
    slab_rows = _round_up(n_rows, 8)
    data = jnp.zeros((slab_rows, P_pad), jnp.float32)
    data = data.at[0:Cx, 0:P].set(x_f)
    data = data.at[Cx:Cx + Cy, 0:P].set(y_f)
    data = data.at[Cx + Cy:n_rows, 0:P].set(eps_f)

    w_slab, b_slab, w_offs, b_offs = pack_params(params, Cx, Cy, Cz, Hq, Hp)

    kernel = partial(cvae_kernel,
                     Cx=Cx, Cy=Cy, Cz=Cz, Hq=Hq, Hp=Hp,
                     tile=tile, tiles_per_split=tiles_per_split, P=P,
                     needs_mask=needs_mask, w_offs=w_offs, b_offs=b_offs)

    data_spec = pl.BlockSpec((slab_rows, tile),
                             lambda c, i: (0, c * tiles_per_split + i))
    w_spec = pl.BlockSpec(w_slab.shape, lambda c, i: (0, 0))   # VMEM-resident
    b_spec = pl.BlockSpec(b_slab.shape, lambda c, i: (0, 0))
    xmu_spec = pl.BlockSpec((Cx, tile),
                            lambda c, i: (0, c * tiles_per_split + i))
    ll_spec = pl.BlockSpec((1, Cx, 1), lambda c, i: (c, 0, 0))  # per-split partial
    kl_spec = pl.BlockSpec((1, 1, 1), lambda c, i: (c, 0, 0))   # per-split partial

    out_shape = (jax.ShapeDtypeStruct((Cx, P_pad), jnp.float32),
                 jax.ShapeDtypeStruct((n_splits_eff, Cx, 1), jnp.float32),
                 jax.ShapeDtypeStruct((n_splits_eff, 1, 1), jnp.float32))

    xmu_full, ll_parts, kl_parts = pl.pallas_call(
        kernel,
        out_shape=out_shape,
        grid_spec=pltpu.PrefetchScalarGridSpec(
            num_scalar_prefetch=0,
            grid=(n_splits_eff, tiles_per_split),
            in_specs=[data_spec, w_spec, b_spec],
            out_specs=(xmu_spec, ll_spec, kl_spec),
            scratch_shapes=[pltpu.VMEM((Cz, tile), jnp.float32),   # KL partials
                            pltpu.VMEM((Cx, tile), jnp.float32)]),  # loglik partials
        compiler_params=pltpu.CompilerParams(
            # axis 0 = core split (v7x megacore), axis 1 = pixel reduction.
            dimension_semantics=("parallel", "arbitrary"),
            vmem_limit_bytes=32 * 1024 * 1024),
    )(data, w_slab, b_slab)

    # Trivial follow-up math on the per-split partials.
    kl = kl_parts.sum() * (0.5 / M)
    loglik = -0.5 * LOG_2PI + ll_parts.sum(axis=0).reshape(Cx) / (M * L)
    elbo = -BETA_KL * kl + LIK_SCALE * jnp.sum(loglik)
    return elbo, loglik, kl, xmu_full[:, :P]


# ------------------------------------------------------- pure-JAX reference
def reference_forward(p, x, y, eps):
    M, Cx, H, W = x.shape
    L, _, Cz, _, _ = eps.shape
    x_f = nchw_to_cm(x)
    y_f = nchw_to_cm(y)
    eps_f = nchw_to_cm(eps.reshape(L * M, Cz, H, W))

    hx = _lrelu(p["wqx"] @ x_f + p["bqx"])
    hy = _lrelu(p["wqy"] @ y_f + p["bqy"])
    h1 = _lrelu(p["wq1x"] @ hx + p["wq1y"] @ hy + p["bq1"])
    z_mu = p["wq2mu"] @ h1 + p["bq2mu"]
    z_lv = p["wq2lv"] @ h1 + p["bq2lv"]
    kl = (0.5 / M) * jnp.sum(z_mu ** 2 + jnp.exp(z_lv) - z_lv - 1.0)

    z = z_mu + eps_f * (jnp.exp(0.5 * z_lv) + MIN_Z_VAR)
    hz = _lrelu(p["wpz"] @ z + p["bpz"])
    hy2 = _lrelu(p["wpy"] @ y_f + p["bpy"])
    h1p = _lrelu(p["wp1z"] @ hz + p["wp1y"] @ hy2 + p["bp1"])
    xmu = p["wmu"] @ h1p + p["bmu"]

    loglik = -0.5 * LOG_2PI + jnp.sum(-0.5 * (x_f - xmu) ** 2, axis=1) / (M * L)
    elbo = -BETA_KL * kl + LIK_SCALE * jnp.sum(loglik)
    return elbo, loglik, kl, xmu


# ------------------------------------------------------------------- params
def init_params(key, Cx, Cy, Cz, Hq, Hp):
    # Weights stored channel-major: (C_out, C_in); biases (C_out, 1).
    names_shapes = [
        ("wqx", (Hq, Cx)), ("bqx", (Hq, 1)),
        ("wqy", (Hq, Cy)), ("bqy", (Hq, 1)),
        ("wq1x", (Hq, Hq)), ("wq1y", (Hq, Hq)), ("bq1", (Hq, 1)),
        ("wq2mu", (Cz, Hq)), ("bq2mu", (Cz, 1)),
        ("wq2lv", (Cz, Hq)), ("bq2lv", (Cz, 1)),
        ("wpz", (Hp, Cz)), ("bpz", (Hp, 1)),
        ("wpy", (Hp, Cy)), ("bpy", (Hp, 1)),
        ("wp1z", (Hp, Hp)), ("wp1y", (Hp, Hp)), ("bp1", (Hp, 1)),
        ("wmu", (Cx, Hp)), ("bmu", (Cx, 1)),
    ]
    keys = jax.random.split(key, len(names_shapes))
    params = {}
    for (name, shape), k in zip(names_shapes, keys):
        std = 0.02 if name.startswith("b") else 0.2
        params[name] = (std * jax.random.normal(k, shape)).astype(jnp.float32)
    return params


# --------------------------------------------------------------------- main
if __name__ == "__main__":
    # TODO(synk): L>1 replication, predict_var head, aux_label merge and a
    # learned prior network are not part of this chosen 'Type-1' architecture.
    M, Cx, Cy, Cz, H, W, L = 2, 2, 1, 2, 16, 16, 1
    Hq = Hp = 8

    key = jax.random.PRNGKey(0)
    kx, ky, keps, kp = jax.random.split(key, 4)
    x = jax.random.normal(kx, (M, Cx, H, W), dtype=jnp.float32)
    y = jax.random.normal(ky, (M, Cy, H, W), dtype=jnp.float32)
    eps = jax.random.normal(keps, (L, M, Cz, H, W), dtype=jnp.float32)
    params = init_params(kp, Cx, Cy, Cz, Hq, Hp)

    ref = jax.jit(reference_forward)

    def check(fwd_fn, xx, yy, ee):
        elbo, ll, kl, xmu = fwd_fn(params, xx, yy, ee)
        jax.block_until_ready(elbo)
        elbo_r, ll_r, kl_r, xmu_r = ref(params, xx, yy, ee)
        np.testing.assert_allclose(np.asarray(xmu), np.asarray(xmu_r),
                                   rtol=1e-5, atol=1e-5)
        np.testing.assert_allclose(np.asarray(kl), np.asarray(kl_r),
                                   rtol=1e-4, atol=1e-4)
        np.testing.assert_allclose(np.asarray(ll), np.asarray(ll_r),
                                   rtol=1e-4, atol=1e-4)
        np.testing.assert_allclose(np.asarray(elbo), np.asarray(elbo_r),
                                   rtol=1e-4, atol=1e-4)
        assert np.isfinite(np.asarray(elbo)).all()

    # 1) default config: single large pixel tile (caps at the padded P).
    check(jax.jit(partial(cvae_forward)), x, y, eps)

    # 2) multi-tile + 2-way core split: exercises accumulators & parallel axis.
    check(jax.jit(partial(cvae_forward, tile_p=128, n_splits=2)), x, y, eps)

    # 3) ragged pixel count (P=384, not a tile multiple): exercises tail masking.
    W3 = 12
    x3 = jax.random.normal(kx, (M, Cx, H, W3), dtype=jnp.float32)
    y3 = jax.random.normal(ky, (M, Cy, H, W3), dtype=jnp.float32)
    eps3 = jax.random.normal(keps, (L, M, Cz, H, W3), dtype=jnp.float32)
    check(jax.jit(partial(cvae_forward, tile_p=256, n_splits=2)), x3, y3, eps3)

    print("KERNEL_OK")
</pallas_src>

<mosaic_0001>
module attributes {stable_mosaic.version = 11 : i64} {
  func.func @cvae_kernel(%arg0: i32, %arg1: i32, %arg2: memref<8x512xf32, #tpu.memory_space<vmem>>, %arg3: memref<72x16xf32, #tpu.memory_space<vmem>>, %arg4: memref<64x1xf32, #tpu.memory_space<vmem>>, %arg5: memref<2x512xf32, #tpu.memory_space<vmem>>, %arg6: memref<1x2x1xf32, #tpu.memory_space<vmem>>, %arg7: memref<1x1x1xf32, #tpu.memory_space<vmem>>, %arg8: memref<2x512xf32, #tpu.memory_space<vmem>>, %arg9: memref<2x512xf32, #tpu.memory_space<vmem>>) attributes {dimension_semantics = [#tpu.dimension_semantics<parallel>, #tpu.dimension_semantics<arbitrary>], iteration_bounds = array<i64: 1, 1>, scalar_prefetch = 0 : i64, scratch_operands = 2 : i64, tpu.core_type = #tpu.core_type<tc>, window_params = [{transform_indices = @transform_0, window_bounds = array<i64: 8, 512>}, {pipeline_mode = #tpu.pipeline_mode<synchronous>, transform_indices = @transform_1, window_bounds = array<i64: 72, 16>}, {pipeline_mode = #tpu.pipeline_mode<synchronous>, transform_indices = @transform_2, window_bounds = array<i64: 64, 1>}, {transform_indices = @transform_3, window_bounds = array<i64: 2, 512>}, {transform_indices = @transform_4, window_bounds = array<i64: 1, 2, 1>}, {transform_indices = @transform_5, window_bounds = array<i64: 1, 1, 1>}]} {
    %c0_i32 = arith.constant 0 : i32
    %0 = arith.cmpi eq, %arg1, %c0_i32 : i32
    %1 = arith.extui %0 : i1 to i32
    %c0_i32_0 = arith.constant 0 : i32
    %2 = arith.cmpi ne, %1, %c0_i32_0 : i32
    scf.if %2 {
      %cst_49 = arith.constant 0.000000e+00 : f32
      %82 = vector.broadcast %cst_49 : f32 to vector<2x512xf32>
      %c0_50 = arith.constant 0 : index
      %c0_51 = arith.constant 0 : index
      %83 = vector.load %arg8[%c0_50, %c0_51] : memref<2x512xf32, #tpu.memory_space<vmem>>, vector<2x512xf32>
      tpu.vector_store %arg8[%c0_50, %c0_51], %82 {strides = array<i32>} : memref<2x512xf32, #tpu.memory_space<vmem>>, vector<2x512xf32>,
      %cst_52 = arith.constant 0.000000e+00 : f32
      %84 = vector.broadcast %cst_52 : f32 to vector<2x512xf32>
      %c0_53 = arith.constant 0 : index
      %c0_54 = arith.constant 0 : index
      %85 = vector.load %arg9[%c0_53, %c0_54] : memref<2x512xf32, #tpu.memory_space<vmem>>, vector<2x512xf32>
      tpu.vector_store %arg9[%c0_53, %c0_54], %84 {strides = array<i32>} : memref<2x512xf32, #tpu.memory_space<vmem>>, vector<2x512xf32>,
    } else {
    }
    %c0 = arith.constant 0 : index
    %c0_1 = arith.constant 0 : index
    %3 = vector.load %arg3[%c0, %c0_1] : memref<72x16xf32, #tpu.memory_space<vmem>>, vector<24x3xf32>
    %c24 = arith.constant 24 : index
    %c0_2 = arith.constant 0 : index
    %4 = vector.load %arg3[%c24, %c0_2] : memref<72x16xf32, #tpu.memory_space<vmem>>, vector<8x16xf32>
    %c32 = arith.constant 32 : index
    %c0_3 = arith.constant 0 : index
    %5 = vector.load %arg3[%c32, %c0_3] : memref<72x16xf32, #tpu.memory_space<vmem>>, vector<4x8xf32>
    %c40 = arith.constant 40 : index
    %c0_4 = arith.constant 0 : index
    %6 = vector.load %arg3[%c40, %c0_4] : memref<72x16xf32, #tpu.memory_space<vmem>>, vector<8x2xf32>
    %c48 = arith.constant 48 : index
    %c0_5 = arith.constant 0 : index
    %7 = vector.load %arg3[%c48, %c0_5] : memref<72x16xf32, #tpu.memory_space<vmem>>, vector<8x8xf32>
    %c56 = arith.constant 56 : index
    %c0_6 = arith.constant 0 : index
    %8 = vector.load %arg3[%c56, %c0_6] : memref<72x16xf32, #tpu.memory_space<vmem>>, vector<8x8xf32>
    %c64 = arith.constant 64 : index
    %c0_7 = arith.constant 0 : index
    %9 = vector.load %arg3[%c64, %c0_7] : memref<72x16xf32, #tpu.memory_space<vmem>>, vector<2x8xf32>
    %c0_8 = arith.constant 0 : index
    %c0_9 = arith.constant 0 : index
    %10 = vector.load %arg4[%c0_8, %c0_9] : memref<64x1xf32, #tpu.memory_space<vmem>>, vector<24x1xf32>
    %c24_10 = arith.constant 24 : index
    %c0_11 = arith.constant 0 : index
    %11 = vector.load %arg4[%c24_10, %c0_11] : memref<64x1xf32, #tpu.memory_space<vmem>>, vector<8x1xf32>
    %c32_12 = arith.constant 32 : index
    %c0_13 = arith.constant 0 : index
    %12 = vector.load %arg4[%c32_12, %c0_13] : memref<64x1xf32, #tpu.memory_space<vmem>>, vector<4x1xf32>
    %c40_14 = arith.constant 40 : index
    %c0_15 = arith.constant 0 : index
    %13 = vector.load %arg4[%c40_14, %c0_15] : memref<64x1xf32, #tpu.memory_space<vmem>>, vector<8x1xf32>
    %c48_16 = arith.constant 48 : index
    %c0_17 = arith.constant 0 : index
    %14 = vector.load %arg4[%c48_16, %c0_17] : memref<64x1xf32, #tpu.memory_space<vmem>>, vector<8x1xf32>
    %c56_18 = arith.constant 56 : index
    %c0_19 = arith.constant 0 : index
    %15 = vector.load %arg4[%c56_18, %c0_19] : memref<64x1xf32, #tpu.memory_space<vmem>>, vector<2x1xf32>
    %c0_20 = arith.constant 0 : index
    %c0_21 = arith.constant 0 : index
    %16 = vector.load %arg2[%c0_20, %c0_21] : memref<8x512xf32, #tpu.memory_space<vmem>>, vector<3x512xf32>
    %17 = vector.extract_strided_slice %16 {offsets = [0, 0], sizes = [2, 512], strides = [1, 1]} : vector<3x512xf32> to vector<2x512xf32>
    %c3 = arith.constant 3 : index
    %c0_22 = arith.constant 0 : index
    %18 = vector.load %arg2[%c3, %c0_22] : memref<8x512xf32, #tpu.memory_space<vmem>>, vector<2x512xf32>
    %cst = arith.constant dense<0.000000e+00> : vector<24x512xf32>
    %19 = tpu.matmul %3, %16, %cst {dimension_numbers = #tpu.dot_dimension_numbers<[1], [0], [0], [1], [0, 0, 1, 1], [], []>} : vector<24x3xf32>, vector<3x512xf32>, vector<24x512xf32> -> vector<24x512xf32>
    %20 = vector.broadcast %10 : vector<24x1xf32> to vector<24x512xf32>
    %21 = arith.addf %19, %20 : vector<24x512xf32>
    %cst_23 = arith.constant 1.000000e-01 : f32
    %22 = vector.broadcast %cst_23 : f32 to vector<24x512xf32>
    %23 = arith.mulf %22, %21 : vector<24x512xf32>
    %24 = arith.maximumf %21, %23 : vector<24x512xf32>
    %25 = vector.extract_strided_slice %24 {offsets = [0, 0], sizes = [16, 512], strides = [1, 1]} : vector<24x512xf32> to vector<16x512xf32>
    %26 = vector.extract_strided_slice %24 {offsets = [16, 0], sizes = [8, 512], strides = [1, 1]} : vector<24x512xf32> to vector<8x512xf32>
    %cst_24 = arith.constant dense<0.000000e+00> : vector<8x512xf32>
    %27 = tpu.matmul %4, %25, %cst_24 {dimension_numbers = #tpu.dot_dimension_numbers<[1], [0], [0], [1], [0, 0, 1, 1], [], []>} : vector<8x16xf32>, vector<16x512xf32>, vector<8x512xf32> -> vector<8x512xf32>
    %28 = vector.broadcast %11 : vector<8x1xf32> to vector<8x512xf32>
    %29 = arith.addf %27, %28 : vector<8x512xf32>
    %cst_25 = arith.constant 1.000000e-01 : f32
    %30 = vector.broadcast %cst_25 : f32 to vector<8x512xf32>
    %31 = arith.mulf %30, %29 : vector<8x512xf32>
    %32 = arith.maximumf %29, %31 : vector<8x512xf32>
    %cst_26 = arith.constant dense<0.000000e+00> : vector<4x512xf32>
    %33 = tpu.matmul %5, %32, %cst_26 {dimension_numbers = #tpu.dot_dimension_numbers<[1], [0], [0], [1], [0, 0, 1, 1], [], []>} : vector<4x8xf32>, vector<8x512xf32>, vector<4x512xf32> -> vector<4x512xf32>
    %34 = vector.broadcast %12 : vector<4x1xf32> to vector<4x512xf32>
    %35 = arith.addf %33, %34 : vector<4x512xf32>
    %36 = vector.extract_strided_slice %35 {offsets = [0, 0], sizes = [2, 512], strides = [1, 1]} : vector<4x512xf32> to vector<2x512xf32>
    %37 = vector.extract_strided_slice %35 {offsets = [2, 0], sizes = [2, 512], strides = [1, 1]} : vector<4x512xf32> to vector<2x512xf32>
    %cst_27 = arith.constant 5.000000e-01 : f32
    %38 = vector.broadcast %cst_27 : f32 to vector<2x512xf32>
    %39 = arith.mulf %38, %37 : vector<2x512xf32>
    %40 = math.exp %39 : vector<2x512xf32>
    %41 = arith.mulf %36, %36 : vector<2x512xf32>
    %42 = arith.mulf %40, %40 : vector<2x512xf32>
    %43 = arith.addf %41, %42 : vector<2x512xf32>
    %44 = arith.subf %43, %37 : vector<2x512xf32>
    %cst_28 = arith.constant 1.000000e+00 : f32
    %45 = vector.broadcast %cst_28 : f32 to vector<2x512xf32>
    %46 = arith.subf %44, %45 : vector<2x512xf32>
    %cst_29 = arith.constant 1.000000e-07 : f32
    %47 = vector.broadcast %cst_29 : f32 to vector<2x512xf32>
    %48 = arith.addf %40, %47 : vector<2x512xf32>
    %49 = arith.mulf %18, %48 : vector<2x512xf32>
    %50 = arith.addf %36, %49 : vector<2x512xf32>
    %cst_30 = arith.constant dense<0.000000e+00> : vector<8x512xf32>
    %51 = tpu.matmul %6, %50, %cst_30 {dimension_numbers = #tpu.dot_dimension_numbers<[1], [0], [0], [1], [0, 0, 1, 1], [], []>} : vector<8x2xf32>, vector<2x512xf32>, vector<8x512xf32> -> vector<8x512xf32>
    %52 = vector.broadcast %13 : vector<8x1xf32> to vector<8x512xf32>
    %53 = arith.addf %51, %52 : vector<8x512xf32>
    %cst_31 = arith.constant 1.000000e-01 : f32
    %54 = vector.broadcast %cst_31 : f32 to vector<8x512xf32>
    %55 = arith.mulf %54, %53 : vector<8x512xf32>
    %56 = arith.maximumf %53, %55 : vector<8x512xf32>
    %cst_32 = arith.constant dense<0.000000e+00> : vector<8x512xf32>
    %57 = tpu.matmul %7, %56, %cst_32 {dimension_numbers = #tpu.dot_dimension_numbers<[1], [0], [0], [1], [0, 0, 1, 1], [], []>} : vector<8x8xf32>, vector<8x512xf32>, vector<8x512xf32> -> vector<8x512xf32>
    %cst_33 = arith.constant dense<0.000000e+00> : vector<8x512xf32>
    %58 = tpu.matmul %8, %26, %cst_33 {dimension_numbers = #tpu.dot_dimension_numbers<[1], [0], [0], [1], [0, 0, 1, 1], [], []>} : vector<8x8xf32>, vector<8x512xf32>, vector<8x512xf32> -> vector<8x512xf32>
    %59 = arith.addf %57, %58 : vector<8x512xf32>
    %60 = vector.broadcast %14 : vector<8x1xf32> to vector<8x512xf32>
    %61 = arith.addf %59, %60 : vector<8x512xf32>
    %cst_34 = arith.constant 1.000000e-01 : f32
    %62 = vector.broadcast %cst_34 : f32 to vector<8x512xf32>
    %63 = arith.mulf %62, %61 : vector<8x512xf32>
    %64 = arith.maximumf %61, %63 : vector<8x512xf32>
    %cst_35 = arith.constant dense<0.000000e+00> : vector<2x512xf32>
    %65 = tpu.matmul %9, %64, %cst_35 {dimension_numbers = #tpu.dot_dimension_numbers<[1], [0], [0], [1], [0, 0, 1, 1], [], []>} : vector<2x8xf32>, vector<8x512xf32>, vector<2x512xf32> -> vector<2x512xf32>
    %66 = vector.broadcast %15 : vector<2x1xf32> to vector<2x512xf32>
    %67 = arith.addf %65, %66 : vector<2x512xf32>
    %c0_36 = arith.constant 0 : index
    %c0_37 = arith.constant 0 : index
    %68 = vector.load %arg5[%c0_36, %c0_37] : memref<2x512xf32, #tpu.memory_space<vmem>>, vector<2x512xf32>
    tpu.vector_store %arg5[%c0_36, %c0_37], %67 {strides = array<i32>} : memref<2x512xf32, #tpu.memory_space<vmem>>, vector<2x512xf32>,
    %69 = arith.subf %17, %67 : vector<2x512xf32>
    %cst_38 = arith.constant -5.000000e-01 : f32
    %70 = vector.broadcast %cst_38 : f32 to vector<2x512xf32>
    %71 = arith.mulf %70, %69 : vector<2x512xf32>
    %72 = arith.mulf %71, %69 : vector<2x512xf32>
    %c0_39 = arith.constant 0 : index
    %c0_40 = arith.constant 0 : index
    %73 = vector.load %arg8[%c0_39, %c0_40] : memref<2x512xf32, #tpu.memory_space<vmem>>, vector<2x512xf32>
    %74 = arith.addf %73, %46 : vector<2x512xf32>
    %c0_41 = arith.constant 0 : index
    %c0_42 = arith.constant 0 : index
    %75 = vector.load %arg8[%c0_41, %c0_42] : memref<2x512xf32, #tpu.memory_space<vmem>>, vector<2x512xf32>
    tpu.vector_store %arg8[%c0_41, %c0_42], %74 {strides = array<i32>} : memref<2x512xf32, #tpu.memory_space<vmem>>, vector<2x512xf32>,
    %c0_43 = arith.constant 0 : index
    %c0_44 = arith.constant 0 : index
    %76 = vector.load %arg9[%c0_43, %c0_44] : memref<2x512xf32, #tpu.memory_space<vmem>>, vector<2x512xf32>
    %77 = arith.addf %76, %72 : vector<2x512xf32>
    %c0_45 = arith.constant 0 : index
    %c0_46 = arith.constant 0 : index
    %78 = vector.load %arg9[%c0_45, %c0_46] : memref<2x512xf32, #tpu.memory_space<vmem>>, vector<2x512xf32>
    tpu.vector_store %arg9[%c0_45, %c0_46], %77 {strides = array<i32>} : memref<2x512xf32, #tpu.memory_space<vmem>>, vector<2x512xf32>,
    %c0_i32_47 = arith.constant 0 : i32
    %79 = arith.cmpi eq, %arg1, %c0_i32_47 : i32
    %80 = arith.extui %79 : i1 to i32
    %c0_i32_48 = arith.constant 0 : i32
    %81 = arith.cmpi ne, %80, %c0_i32_48 : i32
    scf.if %81 {
      %c0_49 = arith.constant 0 : index
      %c0_50 = arith.constant 0 : index
      %82 = vector.load %arg8[%c0_49, %c0_50] : memref<2x512xf32, #tpu.memory_space<vmem>>, vector<2x512xf32>
      %83 = vector.shape_cast %82 : vector<2x512xf32> to vector<1x2x512xf32>
      %cst_51 = arith.constant dense<0.000000e+00> : vector<1xf32>
      %84 = vector.multi_reduction <add>, %83, %cst_51 [1, 2] : vector<1x2x512xf32> to vector<1xf32>
      %85 = vector.shape_cast %84 : vector<1xf32> to vector<1x1x1xf32>
      %86 = vector.extract %85[0, 0, 0] : f32 from vector<1x1x1xf32>
      %87 = vector.broadcast %86 : f32 to vector<1x1xf32>
      %88 = vector.shape_cast %87 : vector<1x1xf32> to vector<1x1x1xf32>
      %c0_52 = arith.constant 0 : index
      %c0_53 = arith.constant 0 : index
      %c0_54 = arith.constant 0 : index
      %89 = vector.load %arg7[%c0_52, %c0_53, %c0_54] : memref<1x1x1xf32, #tpu.memory_space<vmem>>, vector<1x1x1xf32>
      tpu.vector_store %arg7[%c0_52, %c0_53, %c0_54], %88 {strides = array<i32>} : memref<1x1x1xf32, #tpu.memory_space<vmem>>, vector<1x1x1xf32>,
      %c0_55 = arith.constant 0 : index
      %c0_56 = arith.constant 0 : index
      %90 = vector.load %arg9[%c0_55, %c0_56] : memref<2x512xf32, #tpu.memory_space<vmem>>, vector<2x512xf32>
      %cst_57 = arith.constant dense<0.000000e+00> : vector<2xf32>
      %91 = vector.multi_reduction <add>, %90, %cst_57 [1] : vector<2x512xf32> to vector<2xf32>
      %92 = vector.shape_cast %91 : vector<2xf32> to vector<2x1xf32>
      %93 = vector.shape_cast %92 : vector<2x1xf32> to vector<1x2x1xf32>
      %c0_58 = arith.constant 0 : index
      %c0_59 = arith.constant 0 : index
      %c0_60 = arith.constant 0 : index
      %94 = vector.load %arg6[%c0_58, %c0_59, %c0_60] : memref<1x2x1xf32, #tpu.memory_space<vmem>>, vector<1x2x1xf32>
      tpu.vector_store %arg6[%c0_58, %c0_59, %c0_60], %93 {strides = array<i32>} : memref<1x2x1xf32, #tpu.memory_space<vmem>>, vector<1x2x1xf32>,
    } else {
    }
    return
  }
  func.func @transform_0(%arg0: i32, %arg1: i32) -> (i32, i32) {
    %c1_i32 = arith.constant 1 : i32
    %0 = arith.muli %arg0, %c1_i32 : i32
    %1 = arith.addi %0, %arg1 : i32
    %c0_i32 = arith.constant 0 : i32
    %c0_i32_0 = arith.constant 0 : i32
    return %c0_i32, %1 : i32, i32
  }
  func.func @transform_1(%arg0: i32, %arg1: i32) -> (i32, i32) {
    %c0_i32 = arith.constant 0 : i32
    %c0_i32_0 = arith.constant 0 : i32
    %c0_i32_1 = arith.constant 0 : i32
    return %c0_i32, %c0_i32_0 : i32, i32
  }
  func.func @transform_2(%arg0: i32, %arg1: i32) -> (i32, i32) {
    %c0_i32 = arith.constant 0 : i32
    %c0_i32_0 = arith.constant 0 : i32
    %c0_i32_1 = arith.constant 0 : i32
    return %c0_i32, %c0_i32_0 : i32, i32
  }
  func.func @transform_3(%arg0: i32, %arg1: i32) -> (i32, i32) {
    %c1_i32 = arith.constant 1 : i32
    %0 = arith.muli %arg0, %c1_i32 : i32
    %1 = arith.addi %0, %arg1 : i32
    %c0_i32 = arith.constant 0 : i32
    %c0_i32_0 = arith.constant 0 : i32
    return %c0_i32, %1 : i32, i32
  }
  func.func @transform_4(%arg0: i32, %arg1: i32) -> (i32, i32, i32) {
    %c0_i32 = arith.constant 0 : i32
    %c0_i32_0 = arith.constant 0 : i32
    %c0_i32_1 = arith.constant 0 : i32
    return %arg0, %c0_i32, %c0_i32_0 : i32, i32, i32
  }
  func.func @transform_5(%arg0: i32, %arg1: i32) -> (i32, i32, i32) {
    %c0_i32 = arith.constant 0 : i32
    %c0_i32_0 = arith.constant 0 : i32
    %c0_i32_1 = arith.constant 0 : i32
    return %arg0, %c0_i32, %c0_i32_0 : i32, i32, i32
  }
}

</mosaic_0001>

<llo_original>
// kernel: cvae_forward.1
$region0: #{cvae_forward.1}
  #allocation0 [shape = 'u32[]', space=smem, size = 0x4, offset = 0x4, fixed_abs, tag = 'smem constant byte address 0x4 - core index']
  #allocation1 [shape = 'u32[144,128]{1,0:T(1,128)}', space=vmem, size = 0x12000, scoped, tag = 'internal scratch']
  #allocation2 [shape = 'f32[2,512]{1,0:T(2,128)}', space=vmem, size = 0x1000, scoped, tag = 'scratch operand']
  #allocation3 [shape = 'f32[2,512]{1,0:T(2,128)}', space=vmem, size = 0x1000, scoped, tag = 'scratch operand']
  %s0 = inlined_call_operand.vmem [shape: f32[8,512], index: 0, kind: input, shape index: {}]
  %s1 = inlined_call_operand.vmem [shape: f32[72,16], index: 1, kind: input, shape index: {}]
  %s2 = inlined_call_operand.vmem [shape: f32[64,1], index: 2, kind: input, shape index: {}]
  %s3 = inlined_call_operand.hbm [shape: f32[2,512], index: 3, kind: output, shape index: {0}]
  %s4 = inlined_call_operand.vmem [shape: f32[1,2,1], index: 4, kind: output, shape index: {1}]
  %s5 = inlined_call_operand.hbm [shape: f32[1,1,1], index: 5, kind: output, shape index: {2}]
  %6 = xla_tuple %s3, %s4, %s5
  %s7 = sld [smem:[#allocation0]]
  $region46: #{cvae_forward.1} parent=0
    _
  %s9 = ssub.s32 1, %s7
  %s10 = scalar_select 0, %s9, %s7
  $region1: #{cvae_forward.1} parent=0
    #allocation4 [shape = 'u8[4096]{0}', space=vmem, size = 0x1000, scoped, tag = 'output window, operand 0, single buffered']
    #allocation5 [shape = 's32[1]{0}', space=sflag, size = 0x4, scoped, tag = 'scoped memory for cvae_forward.1']
    #allocation6 [shape = 'u8[512]{0}', space=vmem, size = 0x400, scoped, tag = 'output window, operand 2, single buffered']
    #allocation7 [shape = 's32[1]{0}', space=sflag, size = 0x4, scoped, tag = 'scoped memory for cvae_forward.1']
    %11 = vsyncpa [#allocation5], 0
    %12 = vsyncpa [#allocation7], 0
    // Predicated region
    $region2: #{cvae_forward.1} parent=1 // pred_check
      _
    $region3: #{cvae_forward.1} parent=1 // pred_check_branch
      %14 = sbr.rel (0) target = $region5
    $region4: #{cvae_forward.1} parent=1 // pred_region
      %s15 = sadd.s32 0, 0
      %s16 = smul.u32 4, %s15
      %p17 = scmp.lt.s32.totalorder %s16, 3
      %s18 = scalar_select %p17, %s16, 3
      %s19 = smul.addr %s18, 8
      %s20 = scalar_lea.vmem %s0, %s19
      %s21 = sadd.s32 0, 0
      %s22 = smul.u32 4, %s21
    $region5: #{cvae_forward.1} parent=1 // pred_fallthru
      _
    // Predicated region
    $region6: #{cvae_forward.1} parent=1 // pred_check
      _
    $region7: #{cvae_forward.1} parent=1 // pred_check_branch
      %24 = sbr.rel (0) target = $region9
    $region8: #{cvae_forward.1} parent=1 // pred_region
      _
    $region9: #{cvae_forward.1} parent=1 // pred_fallthru
      _
    // Predicated region
    $region10: #{cvae_forward.1} parent=1 // pred_check
      _
    $region11: #{cvae_forward.1} parent=1 // pred_check_branch
      %26 = sbr.rel (0) target = $region13
    $region12: #{cvae_forward.1} parent=1 // pred_region
      _
    $region13: #{cvae_forward.1} parent=1 // pred_fallthru
      _
    %s27 = sadd.s32 0, 0
    %s28 = smul.u32 4, %s27
    %p29 = scmp.lt.s32.totalorder %s28, 3
    %s30 = scalar_select %p29, %s28, 3
    %s31 = smul.addr %s30, 8
    %s32 = scalar_lea.vmem %s0, %s31
    %s33 = sadd.s32 0, 0
    %s34 = smul.u32 4, %s33
    %p35 = scmp.lt.s32.totalorder %s34, 3
    %s36 = scalar_select %p35, %s34, 3
    %s37 = smul.addr %s36, 8
    %s38 = scalar_lea.vmem %s0, %s37
    %s39 = sadd.s32 0, 0
    %s40 = smul.u32 4, %s39
    %s41 = sadd.s32 0, 0
    %s42 = smul.u32 4, %s41
    %p43 = scmp.eq.s32.totalorder 0, 0
    // Predicated region
    $region14: #{cvae_forward.1} parent=1 // pred_check
      %p44 = pneg %p43
    $region15: #{cvae_forward.1} parent=1 // pred_check_branch
      %46 = sbr.rel (%p44) target = $region17
    $region16: #{cvae_forward.1} parent=1 // pred_region
      %47 = vst [vmem:[#allocation2] sm:$0xff] 0.0
      %48 = vst [vmem:[#allocation3] sm:$0xff] 0.0
    $region17: #{cvae_forward.1} parent=1 // pred_fallthru
      _
    %v49 = vld [vmem:[%s1] sm:$0xff]
    %v50 = vld [vmem:[%s1 + $0x8] sm:$0xff]
    %v51 = vld [vmem:[%s1 + $0x10] sm:$0xff]
    %v52 = vld [vmem:[%s1 + $0x18] sm:$0xff]
    %v53 = vld [vmem:[%s1 + $0x20] sm:$0xf]
    %v54 = vld [vmem:[%s1 + $0x28] sm:$0xff]
    %v55 = vld [vmem:[%s1 + $0x30] sm:$0xff]
    %v56 = vld [vmem:[%s1 + $0x38] sm:$0xff]
    %v57 = vld [vmem:[%s1 + $0x40] sm:$0x3]
    %v58 = vld [vmem:[%s2] sm:$0xff]
    %v59 = vld [vmem:[%s2 + $0x8] sm:$0xff]
    %v60 = vld [vmem:[%s2 + $0x10] sm:$0xff]
    %v61 = vld [vmem:[%s2 + $0x18] sm:$0xff]
    %v62 = vld [vmem:[%s2 + $0x20] sm:$0xf]
    %v63 = vld [vmem:[%s2 + $0x28] sm:$0xff]
    %v64 = vld [vmem:[%s2 + $0x30] sm:$0xff]
    %v65 = vld [vmem:[%s2 + $0x38] sm:$0x3]
    %v66 = vld [vmem:[%s38] sm:$0x7]
    %v67 = vld [vmem:[%s38 + $0x8] sm:$0x7]
    %v68 = vld [vmem:[%s38 + $0x10] sm:$0x7]
    %v69 = vld [vmem:[%s38 + $0x18] sm:$0x7]
    %v70 = vld [vmem:[%s38] sm:$0x18]
    %v71 = vld [vmem:[%s38 + $0x8] sm:$0x18]
    %v72 = vld [vmem:[%s38 + $0x10] sm:$0x18]
    %v73 = vld [vmem:[%s38 + $0x18] sm:$0x18]
    %75 = vset.pattern.permute.xlu0 0
    %76 = vperm.xlu0 %75, %v58
    %v77 = vpop.permute.xlu0 %76
    %80 = vset.pattern.permute.xlu0 0
    %81 = vperm.xlu0 %80, %v59
    %v82 = vpop.permute.xlu0 %81
    %85 = vset.pattern.permute.xlu0 0
    %86 = vperm.xlu0 %85, %v60
    %v87 = vpop.permute.xlu0 %86
    %vm89 = vcmask 23552
    %v91 = vsel %vm89, %v49, 0
    %v94 = vsel %vm89, %v50, 0
    %v97 = vsel %vm89, %v51, 0
    %vm99 = vcmask 1042432
    %v101 = vsel %vm99, %v66, 0
    %v104 = vsel %vm99, %v67, 0
    %v107 = vsel %vm99, %v68, 0
    %v110 = vsel %vm99, %v69, 0
    %112 = vmatprep.subr.mxu0 %v104
    %113 = vmatpush1.msra.mxu0 %v101
    %114 = vmatprep.subr.mxu0 0.0
    %115 = vmatpush1.msra.mxu0 0.0
    %116 = vmatprep.subr.mxu0 0.0
    %117 = vmatpush1.msra.mxu0 0.0
    %118 = vmatprep.subr.mxu0 0.0
    %119 = vmatpush1.msra.mxu0 0.0
    %120 = vmatprep.subr.mxu0 0.0
    %121 = vmatpush1.msra.mxu0 0.0
    %122 = vmatprep.subr.mxu0 0.0
    %123 = vmatpush1.msra.mxu0 0.0
    %124 = vmatprep.subr.mxu0 0.0
    %125 = vmatpush1.msra.mxu0 0.0
    %126 = vmatprep.subr.mxu0 0.0
    %127 = vmatpush1.msra.mxu0 0.0
    %128 = vmatprep.subr.mxu0 0.0
    %129 = vmatpush1.msra.mxu0 0.0
    %130 = vmatprep.subr.mxu0 0.0
    %131 = vmatpush1.msra.mxu0 0.0
    %132 = vmatprep.subr.mxu0 0.0
    %133 = vmatpush1.msra.mxu0 0.0
    %134 = vmatprep.subr.mxu0 0.0
    %135 = vmatpush1.msra.mxu0 0.0
    %136 = vmatprep.subr.mxu0 0.0
    %137 = vmatpush1.msra.mxu0 0.0
    %138 = vmatprep.subr.mxu0 0.0
    %139 = vmatpush1.msra.mxu0 0.0
    %140 = vmatprep.subr.mxu0 0.0
    %141 = vmatpush1.msra.mxu0 0.0
    %142 = vmatprep.subr.mxu0 0.0
    %143 = vmatpush1.msra.mxu0 0.0
    %144 = vmatprep.subr.mxu0 0.0
    %145 = vmatpush1.msra.mxu0 0.0
    %146 = vmatprep.subr.mxu0 0.0
    %147 = vmatpush1.msra.mxu0 0.0
    %148 = vmatprep.subr.mxu0 0.0
    %149 = vmatpush1.msra.mxu0 0.0
    %150 = vmatprep.subr.mxu0 0.0
    %151 = vmatpush1.msra.mxu0 0.0
    %152 = vmatprep.subr.mxu0 0.0
    %153 = vmatpush1.msra.mxu0 0.0
    %154 = vmatprep.subr.mxu0 0.0
    %155 = vmatpush1.msra.mxu0 0.0
    %156 = vmatprep.subr.mxu0 0.0
    %157 = vmatpush1.msra.mxu0 0.0
    %158 = vmatprep.subr.mxu0 0.0
    %159 = vmatpush1.msra.mxu0 0.0
    %160 = vmatprep.subr.mxu0 0.0
    %161 = vmatpush1.msra.mxu0 0.0
    %162 = vmatprep.subr.mxu0 0.0
    %163 = vmatpush1.msra.mxu0 0.0
    %164 = vmatprep.subr.mxu0 0.0
    %165 = vmatpush1.msra.mxu0 0.0
    %166 = vmatprep.subr.mxu0 0.0
    %167 = vmatpush1.msra.mxu0 0.0
    %168 = vmatprep.subr.mxu0 0.0
    %169 = vmatpush1.msra.mxu0 0.0
    %170 = vmatprep.subr.mxu0 0.0
    %171 = vmatpush1.msra.mxu0 0.0
    %172 = vmatprep.subr.mxu0 0.0
    %173 = vmatpush1.msra.mxu0 0.0
    %174 = vmatprep.subr.mxu0 0.0
    %175 = vmatpush1.msra.mxu0 0.0
    %176 = vmatprep.mubr.f32.mxu0 0.0
    %177 = vmatmul.mubr.f32.gmra.mrb[0].mxu0 %v91
    %v178 = vpop.f32.mrb[0].mxu0
    %v179 = vadd.f32 %v77, %v178
    %v180 = vpop.f32.mrb[0].mxu0
    %v181 = vadd.f32 %v77, %v180
    %182 = vmatprep.mubr.f32.mxu0 0.0
    %183 = vmatmul.mubr.f32.gmra.mrb[0].mxu0 %v94
    %v184 = vpop.f32.mrb[0].mxu0
    %v185 = vadd.f32 %v82, %v184
    %v186 = vpop.f32.mrb[0].mxu0
    %v187 = vadd.f32 %v82, %v186
    %188 = vmatprep.mubr.f32.mxu0 0.0
    %189 = vmatmul.mubr.f32.gmra.mrb[0].mxu0 %v97
    %v190 = vpop.f32.mrb[0].mxu0
    %v191 = vadd.f32 %v87, %v190
    %v192 = vpop.f32.mrb[0].mxu0
    %v193 = vadd.f32 %v87, %v192
    %194 = vdwg.mxu0
    %195 = vmatprep.subr.mxu0 %v110
    %196 = vmatpush1.msra.mxu0 %v107
    %197 = vmatprep.subr.mxu0 0.0
    %198 = vmatpush1.msra.mxu0 0.0
    %199 = vmatprep.subr.mxu0 0.0
    %200 = vmatpush1.msra.mxu0 0.0
    %201 = vmatprep.subr.mxu0 0.0
    %202 = vmatpush1.msra.mxu0 0.0
    %203 = vmatprep.subr.mxu0 0.0
    %204 = vmatpush1.msra.mxu0 0.0
    %205 = vmatprep.subr.mxu0 0.0
    %206 = vmatpush1.msra.mxu0 0.0
    %207 = vmatprep.subr.mxu0 0.0
    %208 = vmatpush1.msra.mxu0 0.0
    %209 = vmatprep.subr.mxu0 0.0
    %210 = vmatpush1.msra.mxu0 0.0
    %211 = vmatprep.subr.mxu0 0.0
    %212 = vmatpush1.msra.mxu0 0.0
    %213 = vmatprep.subr.mxu0 0.0
    %214 = vmatpush1.msra.mxu0 0.0
    %215 = vmatprep.subr.mxu0 0.0
    %216 = vmatpush1.msra.mxu0 0.0
    %217 = vmatprep.subr.mxu0 0.0
    %218 = vmatpush1.msra.mxu0 0.0
    %219 = vmatprep.subr.mxu0 0.0
    %220 = vmatpush1.msra.mxu0 0.0
    %221 = vmatprep.subr.mxu0 0.0
    %222 = vmatpush1.msra.mxu0 0.0
    %223 = vmatprep.subr.mxu0 0.0
    %224 = vmatpush1.msra.mxu0 0.0
    %225 = vmatprep.subr.mxu0 0.0
    %226 = vmatpush1.msra.mxu0 0.0
    %227 = vmatprep.subr.mxu0 0.0
    %228 = vmatpush1.msra.mxu0 0.0
    %229 = vmatprep.subr.mxu0 0.0
    %230 = vmatpush1.msra.mxu0 0.0
    %231 = vmatprep.subr.mxu0 0.0
    %232 = vmatpush1.msra.mxu0 0.0
    %233 = vmatprep.subr.mxu0 0.0
    %234 = vmatpush1.msra.mxu0 0.0
    %235 = vmatprep.subr.mxu0 0.0
    %236 = vmatpush1.msra.mxu0 0.0
    %237 = vmatprep.subr.mxu0 0.0
    %238 = vmatpush1.msra.mxu0 0.0
    %239 = vmatprep.subr.mxu0 0.0
    %240 = vmatpush1.msra.mxu0 0.0
    %241 = vmatprep.subr.mxu0 0.0
    %242 = vmatpush1.msra.mxu0 0.0
    %243 = vmatprep.subr.mxu0 0.0
    %244 = vmatpush1.msra.mxu0 0.0
    %245 = vmatprep.subr.mxu0 0.0
    %246 = vmatpush1.msra.mxu0 0.0
    %247 = vmatprep.subr.mxu0 0.0
    %248 = vmatpush1.msra.mxu0 0.0
    %249 = vmatprep.subr.mxu0 0.0
    %250 = vmatpush1.msra.mxu0 0.0
    %251 = vmatprep.subr.mxu0 0.0
    %252 = vmatpush1.msra.mxu0 0.0
    %253 = vmatprep.subr.mxu0 0.0
    %254 = vmatpush1.msra.mxu0 0.0
    %255 = vmatprep.subr.mxu0 0.0
    %256 = vmatpush1.msra.mxu0 0.0
    %257 = vmatprep.subr.mxu0 0.0
    %258 = vmatpush1.msra.mxu0 0.0
    %259 = vmatprep.mubr.f32.mxu0 0.0
    %260 = vmatmul.mubr.f32.gmra.mrb[0].mxu0 %v91
    %v261 = vpop.f32.mrb[0].mxu0
    %v262 = vadd.f32 %v77, %v261
    %v263 = vpop.f32.mrb[0].mxu0
    %v264 = vadd.f32 %v77, %v263
    %265 = vmatprep.mubr.f32.mxu0 0.0
    %266 = vmatmul.mubr.f32.gmra.mrb[0].mxu0 %v94
    %v267 = vpop.f32.mrb[0].mxu0
    %v268 = vadd.f32 %v82, %v267
    %v269 = vpop.f32.mrb[0].mxu0
    %v270 = vadd.f32 %v82, %v269
    %271 = vmatprep.mubr.f32.mxu0 0.0
    %272 = vmatmul.mubr.f32.gmra.mrb[0].mxu0 %v97
    %v273 = vpop.f32.mrb[0].mxu0
    %v274 = vadd.f32 %v87, %v273
    %v275 = vpop.f32.mrb[0].mxu0
    %v276 = vadd.f32 %v87, %v275
    %277 = vdwg.mxu0
    %v278 = vmul.f32 %v179, 0.1
    %v279 = vmul.f32 %v181, 0.1
    %v280 = vmul.f32 %v262, 0.1
    %v281 = vmul.f32 %v264, 0.1
    %v282 = vmul.f32 %v185, 0.1
    %v283 = vmul.f32 %v187, 0.1
    %v284 = vmul.f32 %v268, 0.1
    %v285 = vmul.f32 %v270, 0.1
    %v286 = vmul.f32 %v191, 0.1
    %v287 = vmul.f32 %v193, 0.1
    %v288 = vmul.f32 %v274, 0.1
    %v289 = vmul.f32 %v276, 0.1
    %v290 = vmax.f32 %v179, %v278
    %v291 = vmax.f32 %v181, %v279
    %v292 = vmax.f32 %v262, %v280
    %v293 = vmax.f32 %v264, %v281
    %v294 = vmax.f32 %v185, %v282
    %v295 = vmax.f32 %v187, %v283
    %v296 = vmax.f32 %v268, %v284
    %v297 = vmax.f32 %v270, %v285
    %v298 = vmax.f32 %v191, %v286
    %v299 = vmax.f32 %v193, %v287
    %v300 = vmax.f32 %v274, %v288
    %v301 = vmax.f32 %v276, %v289
    %303 = vset.pattern.permute.xlu0 0
    %304 = vperm.xlu0 %303, %v61
    %v305 = vpop.permute.xlu0 %304
    %vm307 = vcmask 130048
    %v309 = vsel %vm307, %v52, 0
    %311 = vmatprep.subr.mxu0 %v291
    %312 = vmatpush1.msra.mxu0 %v290
    %313 = vmatprep.subr.mxu0 %v295
    %314 = vmatpush1.msra.mxu0 %v294
    %315 = vmatprep.subr.mxu0 0.0
    %316 = vmatpush1.msra.mxu0 0.0
    %317 = vmatprep.subr.mxu0 0.0
    %318 = vmatpush1.msra.mxu0 0.0
    %319 = vmatprep.subr.mxu0 0.0
    %320 = vmatpush1.msra.mxu0 0.0
    %321 = vmatprep.subr.mxu0 0.0
    %322 = vmatpush1.msra.mxu0 0.0
    %323 = vmatprep.subr.mxu0 0.0
    %324 = vmatpush1.msra.mxu0 0.0
    %325 = vmatprep.subr.mxu0 0.0
    %326 = vmatpush1.msra.mxu0 0.0
    %327 = vmatprep.subr.mxu0 0.0
    %328 = vmatpush1.msra.mxu0 0.0
    %329 = vmatprep.subr.mxu0 0.0
    %330 = vmatpush1.msra.mxu0 0.0
    %331 = vmatprep.subr.mxu0 0.0
    %332 = vmatpush1.msra.mxu0 0.0
    %333 = vmatprep.subr.mxu0 0.0
    %334 = vmatpush1.msra.mxu0 0.0
    %335 = vmatprep.subr.mxu0 0.0
    %336 = vmatpush1.msra.mxu0 0.0
    %337 = vmatprep.subr.mxu0 0.0
    %338 = vmatpush1.msra.mxu0 0.0
    %339 = vmatprep.subr.mxu0 0.0
    %340 = vmatpush1.msra.mxu0 0.0
    %341 = vmatprep.subr.mxu0 0.0
    %342 = vmatpush1.msra.mxu0 0.0
    %343 = vmatprep.subr.mxu0 0.0
    %344 = vmatpush1.msra.mxu0 0.0
    %345 = vmatprep.subr.mxu0 0.0
    %346 = vmatpush1.msra.mxu0 0.0
    %347 = vmatprep.subr.mxu0 0.0
    %348 = vmatpush1.msra.mxu0 0.0
    %349 = vmatprep.subr.mxu0 0.0
    %350 = vmatpush1.msra.mxu0 0.0
    %351 = vmatprep.subr.mxu0 0.0
    %352 = vmatpush1.msra.mxu0 0.0
    %353 = vmatprep.subr.mxu0 0.0
    %354 = vmatpush1.msra.mxu0 0.0
    %355 = vmatprep.subr.mxu0 0.0
    %356 = vmatpush1.msra.mxu0 0.0
    %357 = vmatprep.subr.mxu0 0.0
    %358 = vmatpush1.msra.mxu0 0.0
    %359 = vmatprep.subr.mxu0 0.0
    %360 = vmatpush1.msra.mxu0 0.0
    %361 = vmatprep.subr.mxu0 0.0
    %362 = vmatpush1.msra.mxu0 0.0
    %363 = vmatprep.subr.mxu0 0.0
    %364 = vmatpush1.msra.mxu0 0.0
    %365 = vmatprep.subr.mxu0 0.0
    %366 = vmatpush1.msra.mxu0 0.0
    %367 = vmatprep.subr.mxu0 0.0
    %368 = vmatpush1.msra.mxu0 0.0
    %369 = vmatprep.subr.mxu0 0.0
    %370 = vmatpush1.msra.mxu0 0.0
    %371 = vmatprep.subr.mxu0 0.0
    %372 = vmatpush1.msra.mxu0 0.0
    %373 = vmatprep.subr.mxu0 0.0
    %374 = vmatpush1.msra.mxu0 0.0
    %375 = vmatprep.mubr.f32.mxu0 0.0
    %376 = vmatmul.mubr.f32.gmra.mrb[0].mxu0 %v309
    %v377 = vpop.f32.mrb[0].mxu0
    %v378 = vadd.f32 %v305, %v377
    %v379 = vpop.f32.mrb[0].mxu0
    %v380 = vadd.f32 %v305, %v379
    %381 = vdwg.mxu0
    %382 = vmatprep.subr.mxu0 %v293
    %383 = vmatpush1.msra.mxu0 %v292
    %384 = vmatprep.subr.mxu0 %v297
    %385 = vmatpush1.msra.mxu0 %v296
    %386 = vmatprep.subr.mxu0 0.0
    %387 = vmatpush1.msra.mxu0 0.0
    %388 = vmatprep.subr.mxu0 0.0
    %389 = vmatpush1.msra.mxu0 0.0
    %390 = vmatprep.subr.mxu0 0.0
    %391 = vmatpush1.msra.mxu0 0.0
    %392 = vmatprep.subr.mxu0 0.0
    %393 = vmatpush1.msra.mxu0 0.0
    %394 = vmatprep.subr.mxu0 0.0
    %395 = vmatpush1.msra.mxu0 0.0
    %396 = vmatprep.subr.mxu0 0.0
    %397 = vmatpush1.msra.mxu0 0.0
    %398 = vmatprep.subr.mxu0 0.0
    %399 = vmatpush1.msra.mxu0 0.0
    %400 = vmatprep.subr.mxu0 0.0
    %401 = vmatpush1.msra.mxu0 0.0
    %402 = vmatprep.subr.mxu0 0.0
    %403 = vmatpush1.msra.mxu0 0.0
    %404 = vmatprep.subr.mxu0 0.0
    %405 = vmatpush1.msra.mxu0 0.0
    %406 = vmatprep.subr.mxu0 0.0
    %407 = vmatpush1.msra.mxu0 0.0
    %408 = vmatprep.subr.mxu0 0.0
    %409 = vmatpush1.msra.mxu0 0.0
    %410 = vmatprep.subr.mxu0 0.0
    %411 = vmatpush1.msra.mxu0 0.0
    %412 = vmatprep.subr.mxu0 0.0
    %413 = vmatpush1.msra.mxu0 0.0
    %414 = vmatprep.subr.mxu0 0.0
    %415 = vmatpush1.msra.mxu0 0.0
    %416 = vmatprep.subr.mxu0 0.0
    %417 = vmatpush1.msra.mxu0 0.0
    %418 = vmatprep.subr.mxu0 0.0
    %419 = vmatpush1.msra.mxu0 0.0
    %420 = vmatprep.subr.mxu0 0.0
    %421 = vmatpush1.msra.mxu0 0.0
    %422 = vmatprep.subr.mxu0 0.0
    %423 = vmatpush1.msra.mxu0 0.0
    %424 = vmatprep.subr.mxu0 0.0
    %425 = vmatpush1.msra.mxu0 0.0
    %426 = vmatprep.subr.mxu0 0.0
    %427 = vmatpush1.msra.mxu0 0.0
    %428 = vmatprep.subr.mxu0 0.0
    %429 = vmatpush1.msra.mxu0 0.0
    %430 = vmatprep.subr.mxu0 0.0
    %431 = vmatpush1.msra.mxu0 0.0
    %432 = vmatprep.subr.mxu0 0.0
    %433 = vmatpush1.msra.mxu0 0.0
    %434 = vmatprep.subr.mxu0 0.0
    %435 = vmatpush1.msra.mxu0 0.0
    %436 = vmatprep.subr.mxu0 0.0
    %437 = vmatpush1.msra.mxu0 0.0
    %438 = vmatprep.subr.mxu0 0.0
    %439 = vmatpush1.msra.mxu0 0.0
    %440 = vmatprep.subr.mxu0 0.0
    %441 = vmatpush1.msra.mxu0 0.0
    %442 = vmatprep.subr.mxu0 0.0
    %443 = vmatpush1.msra.mxu0 0.0
    %444 = vmatprep.subr.mxu0 0.0
    %445 = vmatpush1.msra.mxu0 0.0
    %446 = vmatprep.mubr.f32.mxu0 0.0
    %447 = vmatmul.mubr.f32.gmra.mrb[0].mxu0 %v309
    %v448 = vpop.f32.mrb[0].mxu0
    %v449 = vadd.f32 %v305, %v448
    %v450 = vpop.f32.mrb[0].mxu0
    %v451 = vadd.f32 %v305, %v450
    %452 = vdwg.mxu0
    %v453 = vmul.f32 %v378, 0.1
    %v454 = vmul.f32 %v380, 0.1
    %v455 = vmul.f32 %v449, 0.1
    %v456 = vmul.f32 %v451, 0.1
    %v457 = vmax.f32 %v378, %v453
    %v458 = vmax.f32 %v380, %v454
    %v459 = vmax.f32 %v449, %v455
    %v460 = vmax.f32 %v451, %v456
    %462 = vset.pattern.permute.xlu0 0
    %463 = vperm.xlu0 %462, %v62
    %v464 = vpop.permute.xlu0 %463
    %vm466 = vcmask 64512
    %v468 = vsel %vm466, %v53, 0
    %470 = vmatprep.subr.mxu0 %v458
    %471 = vmatpush1.msra.mxu0 %v457
    %472 = vmatprep.subr.mxu0 0.0
    %473 = vmatpush1.msra.mxu0 0.0
    %474 = vmatprep.subr.mxu0 0.0
    %475 = vmatpush1.msra.mxu0 0.0
    %476 = vmatprep.subr.mxu0 0.0
    %477 = vmatpush1.msra.mxu0 0.0
    %478 = vmatprep.subr.mxu0 0.0
    %479 = vmatpush1.msra.mxu0 0.0
    %480 = vmatprep.subr.mxu0 0.0
    %481 = vmatpush1.msra.mxu0 0.0
    %482 = vmatprep.subr.mxu0 0.0
    %483 = vmatpush1.msra.mxu0 0.0
    %484 = vmatprep.subr.mxu0 0.0
    %485 = vmatpush1.msra.mxu0 0.0
    %486 = vmatprep.subr.mxu0 0.0
    %487 = vmatpush1.msra.mxu0 0.0
    %488 = vmatprep.subr.mxu0 0.0
    %489 = vmatpush1.msra.mxu0 0.0
    %490 = vmatprep.subr.mxu0 0.0
    %491 = vmatpush1.msra.mxu0 0.0
    %492 = vmatprep.subr.mxu0 0.0
    %493 = vmatpush1.msra.mxu0 0.0
    %494 = vmatprep.subr.mxu0 0.0
    %495 = vmatpush1.msra.mxu0 0.0
    %496 = vmatprep.subr.mxu0 0.0
    %497 = vmatpush1.msra.mxu0 0.0
    %498 = vmatprep.subr.mxu0 0.0
    %499 = vmatpush1.msra.mxu0 0.0
    %500 = vmatprep.subr.mxu0 0.0
    %501 = vmatpush1.msra.mxu0 0.0
    %502 = vmatprep.subr.mxu0 0.0
    %503 = vmatpush1.msra.mxu0 0.0
    %504 = vmatprep.subr.mxu0 0.0
    %505 = vmatpush1.msra.mxu0 0.0
    %506 = vmatprep.subr.mxu0 0.0
    %507 = vmatpush1.msra.mxu0 0.0
    %508 = vmatprep.subr.mxu0 0.0
    %509 = vmatpush1.msra.mxu0 0.0
    %510 = vmatprep.subr.mxu0 0.0
    %511 = vmatpush1.msra.mxu0 0.0
    %512 = vmatprep.subr.mxu0 0.0
    %513 = vmatpush1.msra.mxu0 0.0
    %514 = vmatprep.subr.mxu0 0.0
    %515 = vmatpush1.msra.mxu0 0.0
    %516 = vmatprep.subr.mxu0 0.0
    %517 = vmatpush1.msra.mxu0 0.0
    %518 = vmatprep.subr.mxu0 0.0
    %519 = vmatpush1.msra.mxu0 0.0
    %520 = vmatprep.subr.mxu0 0.0
    %521 = vmatpush1.msra.mxu0 0.0
    %522 = vmatprep.subr.mxu0 0.0
    %523 = vmatpush1.msra.mxu0 0.0
    %524 = vmatprep.subr.mxu0 0.0
    %525 = vmatpush1.msra.mxu0 0.0
    %526 = vmatprep.subr.mxu0 0.0
    %527 = vmatpush1.msra.mxu0 0.0
    %528 = vmatprep.subr.mxu0 0.0
    %529 = vmatpush1.msra.mxu0 0.0
    %530 = vmatprep.subr.mxu0 0.0
    %531 = vmatpush1.msra.mxu0 0.0
    %532 = vmatprep.subr.mxu0 0.0
    %533 = vmatpush1.msra.mxu0 0.0
    %534 = vmatprep.mubr.f32.mxu0 0.0
    %535 = vmatmul.mubr.f32.gmra.mrb[0].mxu0 %v468
    %v536 = vpop.f32.mrb[0].mxu0
    %v537 = vadd.f32 %v464, %v536
    %v538 = vpop.f32.mrb[0].mxu0
    %v539 = vadd.f32 %v464, %v538
    %540 = vdwg.mxu0
    %541 = vmatprep.subr.mxu0 %v460
    %542 = vmatpush1.msra.mxu0 %v459
    %543 = vmatprep.subr.mxu0 0.0
    %544 = vmatpush1.msra.mxu0 0.0
    %545 = vmatprep.subr.mxu0 0.0
    %546 = vmatpush1.msra.mxu0 0.0
    %547 = vmatprep.subr.mxu0 0.0
    %548 = vmatpush1.msra.mxu0 0.0
    %549 = vmatprep.subr.mxu0 0.0
    %550 = vmatpush1.msra.mxu0 0.0
    %551 = vmatprep.subr.mxu0 0.0
    %552 = vmatpush1.msra.mxu0 0.0
    %553 = vmatprep.subr.mxu0 0.0
    %554 = vmatpush1.msra.mxu0 0.0
    %555 = vmatprep.subr.mxu0 0.0
    %556 = vmatpush1.msra.mxu0 0.0
    %557 = vmatprep.subr.mxu0 0.0
    %558 = vmatpush1.msra.mxu0 0.0
    %559 = vmatprep.subr.mxu0 0.0
    %560 = vmatpush1.msra.mxu0 0.0
    %561 = vmatprep.subr.mxu0 0.0
    %562 = vmatpush1.msra.mxu0 0.0
    %563 = vmatprep.subr.mxu0 0.0
    %564 = vmatpush1.msra.mxu0 0.0
    %565 = vmatprep.subr.mxu0 0.0
    %566 = vmatpush1.msra.mxu0 0.0
    %567 = vmatprep.subr.mxu0 0.0
    %568 = vmatpush1.msra.mxu0 0.0
    %569 = vmatprep.subr.mxu0 0.0
    %570 = vmatpush1.msra.mxu0 0.0
    %571 = vmatprep.subr.mxu0 0.0
    %572 = vmatpush1.msra.mxu0 0.0
    %573 = vmatprep.subr.mxu0 0.0
    %574 = vmatpush1.msra.mxu0 0.0
    %575 = vmatprep.subr.mxu0 0.0
    %576 = vmatpush1.msra.mxu0 0.0
    %577 = vmatprep.subr.mxu0 0.0
    %578 = vmatpush1.msra.mxu0 0.0
    %579 = vmatprep.subr.mxu0 0.0
    %580 = vmatpush1.msra.mxu0 0.0
    %581 = vmatprep.subr.mxu0 0.0
    %582 = vmatpush1.msra.mxu0 0.0
    %583 = vmatprep.subr.mxu0 0.0
    %584 = vmatpush1.msra.mxu0 0.0
    %585 = vmatprep.subr.mxu0 0.0
    %586 = vmatpush1.msra.mxu0 0.0
    %587 = vmatprep.subr.mxu0 0.0
    %588 = vmatpush1.msra.mxu0 0.0
    %589 = vmatprep.subr.mxu0 0.0
    %590 = vmatpush1.msra.mxu0 0.0
    %591 = vmatprep.subr.mxu0 0.0
    %592 = vmatpush1.msra.mxu0 0.0
    %593 = vmatprep.subr.mxu0 0.0
    %594 = vmatpush1.msra.mxu0 0.0
    %595 = vmatprep.subr.mxu0 0.0
    %596 = vmatpush1.msra.mxu0 0.0
    %597 = vmatprep.subr.mxu0 0.0
    %598 = vmatpush1.msra.mxu0 0.0
    %599 = vmatprep.subr.mxu0 0.0
    %600 = vmatpush1.msra.mxu0 0.0
    %601 = vmatprep.subr.mxu0 0.0
    %602 = vmatpush1.msra.mxu0 0.0
    %603 = vmatprep.subr.mxu0 0.0
    %604 = vmatpush1.msra.mxu0 0.0
    %605 = vmatprep.mubr.f32.mxu0 0.0
    %606 = vmatmul.mubr.f32.gmra.mrb[0].mxu0 %v468
    %v607 = vpop.f32.mrb[0].mxu0
    %v608 = vadd.f32 %v464, %v607
    %v609 = vpop.f32.mrb[0].mxu0
    %v610 = vadd.f32 %v464, %v609
    %611 = vdwg.mxu0
    %v612 = vmul.f32 %v537, 0.5
    %v613 = vmul.f32 %v539, 0.5
    %v614 = vmul.f32 %v608, 0.5
    %v615 = vmul.f32 %v610, 0.5
    %v616 = vmul.f32 %v612, 1.442695
    %v617 = vpow.pop %v616
    %v618 = vmul.f32 %v613, 1.442695
    %v619 = vpow.pop %v618
    %v620 = vmul.f32 %v614, 1.442695
    %v621 = vpow.pop %v620
    %v622 = vmul.f32 %v615, 1.442695
    %v623 = vpow.pop %v622
    %v624 = vmul.f32 %v537, %v537
    %v625 = vmul.f32 %v539, %v539
    %v626 = vmul.f32 %v608, %v608
    %v627 = vmul.f32 %v610, %v610
    %v628 = vmul.f32 %v617, %v617
    %v629 = vmul.f32 %v619, %v619
    %v630 = vmul.f32 %v621, %v621
    %v631 = vmul.f32 %v623, %v623
    %v636 = vrot.slane %v628, 2
    %v637 = vrot.slane %v629, 2
    %v638 = vrot.slane %v630, 2
    %v639 = vrot.slane %v631, 2
    %v644 = vadd.f32 %v624, %v636
    %v645 = vadd.f32 %v625, %v637
    %v646 = vadd.f32 %v626, %v638
    %v647 = vadd.f32 %v627, %v639
    %v652 = vrot.slane %v537, 2
    %v653 = vrot.slane %v539, 2
    %v654 = vrot.slane %v608, 2
    %v655 = vrot.slane %v610, 2
    %v660 = vsub.f32 %v644, %v652
    %v661 = vsub.f32 %v645, %v653
    %v662 = vsub.f32 %v646, %v654
    %v663 = vsub.f32 %v647, %v655
    %v664 = vsub.f32 %v660, 1.0
    %v665 = vsub.f32 %v661, 1.0
    %v666 = vsub.f32 %v662, 1.0
    %v667 = vsub.f32 %v663, 1.0
    %v668 = vadd.f32 %v617, 1e-07
    %v669 = vadd.f32 %v619, 1e-07
    %v670 = vadd.f32 %v621, 1e-07
    %v671 = vadd.f32 %v623, 1e-07
    %v676 = vrot.slane %v668, 7
    %v677 = vrot.slane %v669, 7
    %v678 = vrot.slane %v670, 7
    %v679 = vrot.slane %v671, 7
    %v684 = vmul.f32 %v70, %v676
    %v685 = vmul.f32 %v71, %v677
    %v686 = vmul.f32 %v72, %v678
    %v687 = vmul.f32 %v73, %v679
    %v692 = vrot.slane %v684, 3
    %v693 = vrot.slane %v685, 3
    %v694 = vrot.slane %v686, 3
    %v695 = vrot.slane %v687, 3
    %v700 = vadd.f32 %v537, %v692
    %v701 = vadd.f32 %v539, %v693
    %v702 = vadd.f32 %v608, %v694
    %v703 = vadd.f32 %v610, %v695
    %705 = vset.pattern.permute.xlu0 0
    %706 = vperm.xlu0 %705, %v63
    %v707 = vpop.permute.xlu0 %706
    %vm709 = vcmask 15360
    %v711 = vsel %vm709, %v54, 0
    %vm713 = vcmask 1041408
    %v715 = vsel %vm713, %v700, 0
    %v718 = vsel %vm713, %v701, 0
    %v721 = vsel %vm713, %v702, 0
    %v724 = vsel %vm713, %v703, 0
    %726 = vmatprep.subr.mxu0 %v718
    %727 = vmatpush1.msra.mxu0 %v715
    %728 = vmatprep.subr.mxu0 0.0
    %729 = vmatpush1.msra.mxu0 0.0
    %730 = vmatprep.subr.mxu0 0.0
    %731 = vmatpush1.msra.mxu0 0.0
    %732 = vmatprep.subr.mxu0 0.0
    %733 = vmatpush1.msra.mxu0 0.0
    %734 = vmatprep.subr.mxu0 0.0
    %735 = vmatpush1.msra.mxu0 0.0
    %736 = vmatprep.subr.mxu0 0.0
    %737 = vmatpush1.msra.mxu0 0.0
    %738 = vmatprep.subr.mxu0 0.0
    %739 = vmatpush1.msra.mxu0 0.0
    %740 = vmatprep.subr.mxu0 0.0
    %741 = vmatpush1.msra.mxu0 0.0
    %742 = vmatprep.subr.mxu0 0.0
    %743 = vmatpush1.msra.mxu0 0.0
    %744 = vmatprep.subr.mxu0 0.0
    %745 = vmatpush1.msra.mxu0 0.0
    %746 = vmatprep.subr.mxu0 0.0
    %747 = vmatpush1.msra.mxu0 0.0
    %748 = vmatprep.subr.mxu0 0.0
    %749 = vmatpush1.msra.mxu0 0.0
    %750 = vmatprep.subr.mxu0 0.0
    %751 = vmatpush1.msra.mxu0 0.0
    %752 = vmatprep.subr.mxu0 0.0
    %753 = vmatpush1.msra.mxu0 0.0
    %754 = vmatprep.subr.mxu0 0.0
    %755 = vmatpush1.msra.mxu0 0.0
    %756 = vmatprep.subr.mxu0 0.0
    %757 = vmatpush1.msra.mxu0 0.0
    %758 = vmatprep.subr.mxu0 0.0
    %759 = vmatpush1.msra.mxu0 0.0
    %760 = vmatprep.subr.mxu0 0.0
    %761 = vmatpush1.msra.mxu0 0.0
    %762 = vmatprep.subr.mxu0 0.0
    %763 = vmatpush1.msra.mxu0 0.0
    %764 = vmatprep.subr.mxu0 0.0
    %765 = vmatpush1.msra.mxu0 0.0
    %766 = vmatprep.subr.mxu0 0.0
    %767 = vmatpush1.msra.mxu0 0.0
    %768 = vmatprep.subr.mxu0 0.0
    %769 = vmatpush1.msra.mxu0 0.0
    %770 = vmatprep.subr.mxu0 0.0
    %771 = vmatpush1.msra.mxu0 0.0
    %772 = vmatprep.subr.mxu0 0.0
    %773 = vmatpush1.msra.mxu0 0.0
    %774 = vmatprep.subr.mxu0 0.0
    %775 = vmatpush1.msra.mxu0 0.0
    %776 = vmatprep.subr.mxu0 0.0
    %777 = vmatpush1.msra.mxu0 0.0
    %778 = vmatprep.subr.mxu0 0.0
    %779 = vmatpush1.msra.mxu0 0.0
    %780 = vmatprep.subr.mxu0 0.0
    %781 = vmatpush1.msra.mxu0 0.0
    %782 = vmatprep.subr.mxu0 0.0
    %783 = vmatpush1.msra.mxu0 0.0
    %784 = vmatprep.subr.mxu0 0.0
    %785 = vmatpush1.msra.mxu0 0.0
    %786 = vmatprep.subr.mxu0 0.0
    %787 = vmatpush1.msra.mxu0 0.0
    %788 = vmatprep.subr.mxu0 0.0
    %789 = vmatpush1.msra.mxu0 0.0
    %790 = vmatprep.mubr.f32.mxu0 0.0
    %791 = vmatmul.mubr.f32.gmra.mrb[0].mxu0 %v711
    %v792 = vpop.f32.mrb[0].mxu0
    %v793 = vadd.f32 %v707, %v792
    %v794 = vpop.f32.mrb[0].mxu0
    %v795 = vadd.f32 %v707, %v794
    %796 = vdwg.mxu0
    %797 = vmatprep.subr.mxu0 %v724
    %798 = vmatpush1.msra.mxu0 %v721
    %799 = vmatprep.subr.mxu0 0.0
    %800 = vmatpush1.msra.mxu0 0.0
    %801 = vmatprep.subr.mxu0 0.0
    %802 = vmatpush1.msra.mxu0 0.0
    %803 = vmatprep.subr.mxu0 0.0
    %804 = vmatpush1.msra.mxu0 0.0
    %805 = vmatprep.subr.mxu0 0.0
    %806 = vmatpush1.msra.mxu0 0.0
    %807 = vmatprep.subr.mxu0 0.0
    %808 = vmatpush1.msra.mxu0 0.0
    %809 = vmatprep.subr.mxu0 0.0
    %810 = vmatpush1.msra.mxu0 0.0
    %811 = vmatprep.subr.mxu0 0.0
    %812 = vmatpush1.msra.mxu0 0.0
    %813 = vmatprep.subr.mxu0 0.0
    %814 = vmatpush1.msra.mxu0 0.0
    %815 = vmatprep.subr.mxu0 0.0
    %816 = vmatpush1.msra.mxu0 0.0
    %817 = vmatprep.subr.mxu0 0.0
    %818 = vmatpush1.msra.mxu0 0.0
    %819 = vmatprep.subr.mxu0 0.0
    %820 = vmatpush1.msra.mxu0 0.0
    %821 = vmatprep.subr.mxu0 0.0
    %822 = vmatpush1.msra.mxu0 0.0
    %823 = vmatprep.subr.mxu0 0.0
    %824 = vmatpush1.msra.mxu0 0.0
    %825 = vmatprep.subr.mxu0 0.0
    %826 = vmatpush1.msra.mxu0 0.0
    %827 = vmatprep.subr.mxu0 0.0
    %828 = vmatpush1.msra.mxu0 0.0
    %829 = vmatprep.subr.mxu0 0.0
    %830 = vmatpush1.msra.mxu0 0.0
    %831 = vmatprep.subr.mxu0 0.0
    %832 = vmatpush1.msra.mxu0 0.0
    %833 = vmatprep.subr.mxu0 0.0
    %834 = vmatpush1.msra.mxu0 0.0
    %835 = vmatprep.subr.mxu0 0.0
    %836 = vmatpush1.msra.mxu0 0.0
    %837 = vmatprep.subr.mxu0 0.0
    %838 = vmatpush1.msra.mxu0 0.0
    %839 = vmatprep.subr.mxu0 0.0
    %840 = vmatpush1.msra.mxu0 0.0
    %841 = vmatprep.subr.mxu0 0.0
    %842 = vmatpush1.msra.mxu0 0.0
    %843 = vmatprep.subr.mxu0 0.0
    %844 = vmatpush1.msra.mxu0 0.0
    %845 = vmatprep.subr.mxu0 0.0
    %846 = vmatpush1.msra.mxu0 0.0
    %847 = vmatprep.subr.mxu0 0.0
    %848 = vmatpush1.msra.mxu0 0.0
    %849 = vmatprep.subr.mxu0 0.0
    %850 = vmatpush1.msra.mxu0 0.0
    %851 = vmatprep.subr.mxu0 0.0
    %852 = vmatpush1.msra.mxu0 0.0
    %853 = vmatprep.subr.mxu0 0.0
    %854 = vmatpush1.msra.mxu0 0.0
    %855 = vmatprep.subr.mxu0 0.0
    %856 = vmatpush1.msra.mxu0 0.0
    %857 = vmatprep.subr.mxu0 0.0
    %858 = vmatpush1.msra.mxu0 0.0
    %859 = vmatprep.subr.mxu0 0.0
    %860 = vmatpush1.msra.mxu0 0.0
    %861 = vmatprep.mubr.f32.mxu0 0.0
    %862 = vmatmul.mubr.f32.gmra.mrb[0].mxu0 %v711
    %v863 = vpop.f32.mrb[0].mxu0
    %v864 = vadd.f32 %v707, %v863
    %v865 = vpop.f32.mrb[0].mxu0
    %v866 = vadd.f32 %v707, %v865
    %867 = vdwg.mxu0
    %v868 = vmul.f32 %v793, 0.1
    %v869 = vmul.f32 %v795, 0.1
    %v870 = vmul.f32 %v864, 0.1
    %v871 = vmul.f32 %v866, 0.1
    %v872 = vmax.f32 %v793, %v868
    %v873 = vmax.f32 %v795, %v869
    %v874 = vmax.f32 %v864, %v870
    %v875 = vmax.f32 %v866, %v871
    %v877 = vsel %vm466, %v56, 0
    %879 = vmatprep.subr.mxu0 %v299
    %880 = vmatpush1.msra.mxu0 %v298
    %881 = vmatprep.subr.mxu0 0.0
    %882 = vmatpush1.msra.mxu0 0.0
    %883 = vmatprep.subr.mxu0 0.0
    %884 = vmatpush1.msra.mxu0 0.0
    %885 = vmatprep.subr.mxu0 0.0
    %886 = vmatpush1.msra.mxu0 0.0
    %887 = vmatprep.subr.mxu0 0.0
    %888 = vmatpush1.msra.mxu0 0.0
    %889 = vmatprep.subr.mxu0 0.0
    %890 = vmatpush1.msra.mxu0 0.0
    %891 = vmatprep.subr.mxu0 0.0
    %892 = vmatpush1.msra.mxu0 0.0
    %893 = vmatprep.subr.mxu0 0.0
    %894 = vmatpush1.msra.mxu0 0.0
    %895 = vmatprep.subr.mxu0 0.0
    %896 = vmatpush1.msra.mxu0 0.0
    %897 = vmatprep.subr.mxu0 0.0
    %898 = vmatpush1.msra.mxu0 0.0
    %899 = vmatprep.subr.mxu0 0.0
    %900 = vmatpush1.msra.mxu0 0.0
    %901 = vmatprep.subr.mxu0 0.0
    %902 = vmatpush1.msra.mxu0 0.0
    %903 = vmatprep.subr.mxu0 0.0
    %904 = vmatpush1.msra.mxu0 0.0
    %905 = vmatprep.subr.mxu0 0.0
    %906 = vmatpush1.msra.mxu0 0.0
    %907 = vmatprep.subr.mxu0 0.0
    %908 = vmatpush1.msra.mxu0 0.0
    %909 = vmatprep.subr.mxu0 0.0
    %910 = vmatpush1.msra.mxu0 0.0
    %911 = vmatprep.subr.mxu0 0.0
    %912 = vmatpush1.msra.mxu0 0.0
    %913 = vmatprep.subr.mxu0 0.0
    %914 = vmatpush1.msra.mxu0 0.0
    %915 = vmatprep.subr.mxu0 0.0
    %916 = vmatpush1.msra.mxu0 0.0
    %917 = vmatprep.subr.mxu0 0.0
    %918 = vmatpush1.msra.mxu0 0.0
    %919 = vmatprep.subr.mxu0 0.0
    %920 = vmatpush1.msra.mxu0 0.0
    %921 = vmatprep.subr.mxu0 0.0
    %922 = vmatpush1.msra.mxu0 0.0
    %923 = vmatprep.subr.mxu0 0.0
    %924 = vmatpush1.msra.mxu0 0.0
    %925 = vmatprep.subr.mxu0 0.0
    %926 = vmatpush1.msra.mxu0 0.0
    %927 = vmatprep.subr.mxu0 0.0
    %928 = vmatpush1.msra.mxu0 0.0
    %929 = vmatprep.subr.mxu0 0.0
    %930 = vmatpush1.msra.mxu0 0.0
    %931 = vmatprep.subr.mxu0 0.0
    %932 = vmatpush1.msra.mxu0 0.0
    %933 = vmatprep.subr.mxu0 0.0
    %934 = vmatpush1.msra.mxu0 0.0
    %935 = vmatprep.subr.mxu0 0.0
    %936 = vmatpush1.msra.mxu0 0.0
    %937 = vmatprep.subr.mxu0 0.0
    %938 = vmatpush1.msra.mxu0 0.0
    %939 = vmatprep.subr.mxu0 0.0
    %940 = vmatpush1.msra.mxu0 0.0
    %941 = vmatprep.subr.mxu0 0.0
    %942 = vmatpush1.msra.mxu0 0.0
    %943 = vmatprep.mubr.f32.mxu0 0.0
    %944 = vmatmul.mubr.f32.gmra.mrb[0].mxu0 %v877
    %v945 = vpop.f32.mrb[0].mxu0
    %v946 = vadd.f32 0.0, %v945
    %v947 = vpop.f32.mrb[0].mxu0
    %v948 = vadd.f32 0.0, %v947
    %949 = vdwg.mxu0
    %950 = vmatprep.subr.mxu0 %v301
    %951 = vmatpush1.msra.mxu0 %v300
    %952 = vmatprep.subr.mxu0 0.0
    %953 = vmatpush1.msra.mxu0 0.0
    %954 = vmatprep.subr.mxu0 0.0
    %955 = vmatpush1.msra.mxu0 0.0
    %956 = vmatprep.subr.mxu0 0.0
    %957 = vmatpush1.msra.mxu0 0.0
    %958 = vmatprep.subr.mxu0 0.0
    %959 = vmatpush1.msra.mxu0 0.0
    %960 = vmatprep.subr.mxu0 0.0
    %961 = vmatpush1.msra.mxu0 0.0
    %962 = vmatprep.subr.mxu0 0.0
    %963 = vmatpush1.msra.mxu0 0.0
    %964 = vmatprep.subr.mxu0 0.0
    %965 = vmatpush1.msra.mxu0 0.0
    %966 = vmatprep.subr.mxu0 0.0
    %967 = vmatpush1.msra.mxu0 0.0
    %968 = vmatprep.subr.mxu0 0.0
    %969 = vmatpush1.msra.mxu0 0.0
    %970 = vmatprep.subr.mxu0 0.0
    %971 = vmatpush1.msra.mxu0 0.0
    %972 = vmatprep.subr.mxu0 0.0
    %973 = vmatpush1.msra.mxu0 0.0
    %974 = vmatprep.subr.mxu0 0.0
    %975 = vmatpush1.msra.mxu0 0.0
    %976 = vmatprep.subr.mxu0 0.0
    %977 = vmatpush1.msra.mxu0 0.0
    %978 = vmatprep.subr.mxu0 0.0
    %979 = vmatpush1.msra.mxu0 0.0
    %980 = vmatprep.subr.mxu0 0.0
    %981 = vmatpush1.msra.mxu0 0.0
    %982 = vmatprep.subr.mxu0 0.0
    %983 = vmatpush1.msra.mxu0 0.0
    %984 = vmatprep.subr.mxu0 0.0
    %985 = vmatpush1.msra.mxu0 0.0
    %986 = vmatprep.subr.mxu0 0.0
    %987 = vmatpush1.msra.mxu0 0.0
    %988 = vmatprep.subr.mxu0 0.0
    %989 = vmatpush1.msra.mxu0 0.0
    %990 = vmatprep.subr.mxu0 0.0
    %991 = vmatpush1.msra.mxu0 0.0
    %992 = vmatprep.subr.mxu0 0.0
    %993 = vmatpush1.msra.mxu0 0.0
    %994 = vmatprep.subr.mxu0 0.0
    %995 = vmatpush1.msra.mxu0 0.0
    %996 = vmatprep.subr.mxu0 0.0
    %997 = vmatpush1.msra.mxu0 0.0
    %998 = vmatprep.subr.mxu0 0.0
    %999 = vmatpush1.msra.mxu0 0.0
    %1000 = vmatprep.subr.mxu0 0.0
    %1001 = vmatpush1.msra.mxu0 0.0
    %1002 = vmatprep.subr.mxu0 0.0
    %1003 = vmatpush1.msra.mxu0 0.0
    %1004 = vmatprep.subr.mxu0 0.0
    %1005 = vmatpush1.msra.mxu0 0.0
    %1006 = vmatprep.subr.mxu0 0.0
    %1007 = vmatpush1.msra.mxu0 0.0
    %1008 = vmatprep.subr.mxu0 0.0
    %1009 = vmatpush1.msra.mxu0 0.0
    %1010 = vmatprep.subr.mxu0 0.0
    %1011 = vmatpush1.msra.mxu0 0.0
    %1012 = vmatprep.subr.mxu0 0.0
    %1013 = vmatpush1.msra.mxu0 0.0
    %1014 = vmatprep.mubr.f32.mxu0 0.0
    %1015 = vmatmul.mubr.f32.gmra.mrb[0].mxu0 %v877
    %v1016 = vpop.f32.mrb[0].mxu0
    %v1017 = vadd.f32 0.0, %v1016
    %v1018 = vpop.f32.mrb[0].mxu0
    %v1019 = vadd.f32 0.0, %v1018
    %1020 = vdwg.mxu0
    %v1022 = vsel %vm466, %v55, 0
    %1024 = vmatprep.subr.mxu0 %v873
    %1025 = vmatpush1.msra.mxu0 %v872
    %1026 = vmatprep.subr.mxu0 0.0
    %1027 = vmatpush1.msra.mxu0 0.0
    %1028 = vmatprep.subr.mxu0 0.0
    %1029 = vmatpush1.msra.mxu0 0.0
    %1030 = vmatprep.subr.mxu0 0.0
    %1031 = vmatpush1.msra.mxu0 0.0
    %1032 = vmatprep.subr.mxu0 0.0
    %1033 = vmatpush1.msra.mxu0 0.0
    %1034 = vmatprep.subr.mxu0 0.0
    %1035 = vmatpush1.msra.mxu0 0.0
    %1036 = vmatprep.subr.mxu0 0.0
    %1037 = vmatpush1.msra.mxu0 0.0
    %1038 = vmatprep.subr.mxu0 0.0
    %1039 = vmatpush1.msra.mxu0 0.0
    %1040 = vmatprep.subr.mxu0 0.0
    %1041 = vmatpush1.msra.mxu0 0.0
    %1042 = vmatprep.subr.mxu0 0.0
    %1043 = vmatpush1.msra.mxu0 0.0
    %1044 = vmatprep.subr.mxu0 0.0
    %1045 = vmatpush1.msra.mxu0 0.0
    %1046 = vmatprep.subr.mxu0 0.0
    %1047 = vmatpush1.msra.mxu0 0.0
    %1048 = vmatprep.subr.mxu0 0.0
    %1049 = vmatpush1.msra.mxu0 0.0
    %1050 = vmatprep.subr.mxu0 0.0
    %1051 = vmatpush1.msra.mxu0 0.0
    %1052 = vmatprep.subr.mxu0 0.0
    %1053 = vmatpush1.msra.mxu0 0.0
    %1054 = vmatprep.subr.mxu0 0.0
    %1055 = vmatpush1.msra.mxu0 0.0
    %1056 = vmatprep.subr.mxu0 0.0
    %1057 = vmatpush1.msra.mxu0 0.0
    %1058 = vmatprep.subr.mxu0 0.0
    %1059 = vmatpush1.msra.mxu0 0.0
    %1060 = vmatprep.subr.mxu0 0.0
    %1061 = vmatpush1.msra.mxu0 0.0
    %1062 = vmatprep.subr.mxu0 0.0
    %1063 = vmatpush1.msra.mxu0 0.0
    %1064 = vmatprep.subr.mxu0 0.0
    %1065 = vmatpush1.msra.mxu0 0.0
    %1066 = vmatprep.subr.mxu0 0.0
    %1067 = vmatpush1.msra.mxu0 0.0
    %1068 = vmatprep.subr.mxu0 0.0
    %1069 = vmatpush1.msra.mxu0 0.0
    %1070 = vmatprep.subr.mxu0 0.0
    %1071 = vmatpush1.msra.mxu0 0.0
    %1072 = vmatprep.subr.mxu0 0.0
    %1073 = vmatpush1.msra.mxu0 0.0
    %1074 = vmatprep.subr.mxu0 0.0
    %1075 = vmatpush1.msra.mxu0 0.0
    %1076 = vmatprep.subr.mxu0 0.0
    %1077 = vmatpush1.msra.mxu0 0.0
    %1078 = vmatprep.subr.mxu0 0.0
    %1079 = vmatpush1.msra.mxu0 0.0
    %1080 = vmatprep.subr.mxu0 0.0
    %1081 = vmatpush1.msra.mxu0 0.0
    %1082 = vmatprep.subr.mxu0 0.0
    %1083 = vmatpush1.msra.mxu0 0.0
    %1084 = vmatprep.subr.mxu0 0.0
    %1085 = vmatpush1.msra.mxu0 0.0
    %1086 = vmatprep.subr.mxu0 0.0
    %1087 = vmatpush1.msra.mxu0 0.0
    %1088 = vmatprep.mubr.f32.mxu0 0.0
    %1089 = vmatmul.mubr.f32.gmra.mrb[0].mxu0 %v1022
    %v1090 = vpop.f32.mrb[0].mxu0
    %v1091 = vadd.f32 %v946, %v1090
    %v1092 = vpop.f32.mrb[0].mxu0
    %v1093 = vadd.f32 %v948, %v1092
    %1094 = vdwg.mxu0
    %1095 = vmatprep.subr.mxu0 %v875
    %1096 = vmatpush1.msra.mxu0 %v874
    %1097 = vmatprep.subr.mxu0 0.0
    %1098 = vmatpush1.msra.mxu0 0.0
    %1099 = vmatprep.subr.mxu0 0.0
    %1100 = vmatpush1.msra.mxu0 0.0
    %1101 = vmatprep.subr.mxu0 0.0
    %1102 = vmatpush1.msra.mxu0 0.0
    %1103 = vmatprep.subr.mxu0 0.0
    %1104 = vmatpush1.msra.mxu0 0.0
    %1105 = vmatprep.subr.mxu0 0.0
    %1106 = vmatpush1.msra.mxu0 0.0
    %1107 = vmatprep.subr.mxu0 0.0
    %1108 = vmatpush1.msra.mxu0 0.0
    %1109 = vmatprep.subr.mxu0 0.0
    %1110 = vmatpush1.msra.mxu0 0.0
    %1111 = vmatprep.subr.mxu0 0.0
    %1112 = vmatpush1.msra.mxu0 0.0
    %1113 = vmatprep.subr.mxu0 0.0
    %1114 = vmatpush1.msra.mxu0 0.0
    %1115 = vmatprep.subr.mxu0 0.0
    %1116 = vmatpush1.msra.mxu0 0.0
    %1117 = vmatprep.subr.mxu0 0.0
    %1118 = vmatpush1.msra.mxu0 0.0
    %1119 = vmatprep.subr.mxu0 0.0
    %1120 = vmatpush1.msra.mxu0 0.0
    %1121 = vmatprep.subr.mxu0 0.0
    %1122 = vmatpush1.msra.mxu0 0.0
    %1123 = vmatprep.subr.mxu0 0.0
    %1124 = vmatpush1.msra.mxu0 0.0
    %1125 = vmatprep.subr.mxu0 0.0
    %1126 = vmatpush1.msra.mxu0 0.0
    %1127 = vmatprep.subr.mxu0 0.0
    %1128 = vmatpush1.msra.mxu0 0.0
    %1129 = vmatprep.subr.mxu0 0.0
    %1130 = vmatpush1.msra.mxu0 0.0
    %1131 = vmatprep.subr.mxu0 0.0
    %1132 = vmatpush1.msra.mxu0 0.0
    %1133 = vmatprep.subr.mxu0 0.0
    %1134 = vmatpush1.msra.mxu0 0.0
    %1135 = vmatprep.subr.mxu0 0.0
    %1136 = vmatpush1.msra.mxu0 0.0
    %1137 = vmatprep.subr.mxu0 0.0
    %1138 = vmatpush1.msra.mxu0 0.0
    %1139 = vmatprep.subr.mxu0 0.0
    %1140 = vmatpush1.msra.mxu0 0.0
    %1141 = vmatprep.subr.mxu0 0.0
    %1142 = vmatpush1.msra.mxu0 0.0
    %1143 = vmatprep.subr.mxu0 0.0
    %1144 = vmatpush1.msra.mxu0 0.0
    %1145 = vmatprep.subr.mxu0 0.0
    %1146 = vmatpush1.msra.mxu0 0.0
    %1147 = vmatprep.subr.mxu0 0.0
    %1148 = vmatpush1.msra.mxu0 0.0
    %1149 = vmatprep.subr.mxu0 0.0
    %1150 = vmatpush1.msra.mxu0 0.0
    %1151 = vmatprep.subr.mxu0 0.0
    %1152 = vmatpush1.msra.mxu0 0.0
    %1153 = vmatprep.subr.mxu0 0.0
    %1154 = vmatpush1.msra.mxu0 0.0
    %1155 = vmatprep.subr.mxu0 0.0
    %1156 = vmatpush1.msra.mxu0 0.0
    %1157 = vmatprep.subr.mxu0 0.0
    %1158 = vmatpush1.msra.mxu0 0.0
    %1159 = vmatprep.mubr.f32.mxu0 0.0
    %1160 = vmatmul.mubr.f32.gmra.mrb[0].mxu0 %v1022
    %v1161 = vpop.f32.mrb[0].mxu0
    %v1162 = vadd.f32 %v1017, %v1161
    %v1163 = vpop.f32.mrb[0].mxu0
    %v1164 = vadd.f32 %v1019, %v1163
    %1165 = vdwg.mxu0
    %1167 = vset.pattern.permute.xlu0 0
    %1168 = vperm.xlu0 %1167, %v64
    %v1169 = vpop.permute.xlu0 %1168
    %v1171 = vadd.f32 %v1091, %v1169
    %v1172 = vadd.f32 %v1093, %v1169
    %v1173 = vadd.f32 %v1162, %v1169
    %v1174 = vadd.f32 %v1164, %v1169
    %v1175 = vmul.f32 %v1171, 0.1
    %v1176 = vmul.f32 %v1172, 0.1
    %v1177 = vmul.f32 %v1173, 0.1
    %v1178 = vmul.f32 %v1174, 0.1
    %v1179 = vmax.f32 %v1171, %v1175
    %v1180 = vmax.f32 %v1172, %v1176
    %v1181 = vmax.f32 %v1173, %v1177
    %v1182 = vmax.f32 %v1174, %v1178
    %1184 = vset.pattern.permute.xlu0 0
    %1185 = vperm.xlu0 %1184, %v65
    %v1186 = vpop.permute.xlu0 %1185
    %v1189 = vsel %vm466, %v57, 0
    %1191 = vmatprep.subr.mxu0 %v1180
    %1192 = vmatpush1.msra.mxu0 %v1179
    %1193 = vmatprep.subr.mxu0 0.0
    %1194 = vmatpush1.msra.mxu0 0.0
    %1195 = vmatprep.subr.mxu0 0.0
    %1196 = vmatpush1.msra.mxu0 0.0
    %1197 = vmatprep.subr.mxu0 0.0
    %1198 = vmatpush1.msra.mxu0 0.0
    %1199 = vmatprep.subr.mxu0 0.0
    %1200 = vmatpush1.msra.mxu0 0.0
    %1201 = vmatprep.subr.mxu0 0.0
    %1202 = vmatpush1.msra.mxu0 0.0
    %1203 = vmatprep.subr.mxu0 0.0
    %1204 = vmatpush1.msra.mxu0 0.0
    %1205 = vmatprep.subr.mxu0 0.0
    %1206 = vmatpush1.msra.mxu0 0.0
    %1207 = vmatprep.subr.mxu0 0.0
    %1208 = vmatpush1.msra.mxu0 0.0
    %1209 = vmatprep.subr.mxu0 0.0
    %1210 = vmatpush1.msra.mxu0 0.0
    %1211 = vmatprep.subr.mxu0 0.0
    %1212 = vmatpush1.msra.mxu0 0.0
    %1213 = vmatprep.subr.mxu0 0.0
    %1214 = vmatpush1.msra.mxu0 0.0
    %1215 = vmatprep.subr.mxu0 0.0
    %1216 = vmatpush1.msra.mxu0 0.0
    %1217 = vmatprep.subr.mxu0 0.0
    %1218 = vmatpush1.msra.mxu0 0.0
    %1219 = vmatprep.subr.mxu0 0.0
    %1220 = vmatpush1.msra.mxu0 0.0
    %1221 = vmatprep.subr.mxu0 0.0
    %1222 = vmatpush1.msra.mxu0 0.0
    %1223 = vmatprep.subr.mxu0 0.0
    %1224 = vmatpush1.msra.mxu0 0.0
    %1225 = vmatprep.subr.mxu0 0.0
    %1226 = vmatpush1.msra.mxu0 0.0
    %1227 = vmatprep.subr.mxu0 0.0
    %1228 = vmatpush1.msra.mxu0 0.0
    %1229 = vmatprep.subr.mxu0 0.0
    %1230 = vmatpush1.msra.mxu0 0.0
    %1231 = vmatprep.subr.mxu0 0.0
    %1232 = vmatpush1.msra.mxu0 0.0
    %1233 = vmatprep.subr.mxu0 0.0
    %1234 = vmatpush1.msra.mxu0 0.0
    %1235 = vmatprep.subr.mxu0 0.0
    %1236 = vmatpush1.msra.mxu0 0.0
    %1237 = vmatprep.subr.mxu0 0.0
    %1238 = vmatpush1.msra.mxu0 0.0
    %1239 = vmatprep.subr.mxu0 0.0
    %1240 = vmatpush1.msra.mxu0 0.0
    %1241 = vmatprep.subr.mxu0 0.0
    %1242 = vmatpush1.msra.mxu0 0.0
    %1243 = vmatprep.subr.mxu0 0.0
    %1244 = vmatpush1.msra.mxu0 0.0
    %1245 = vmatprep.subr.mxu0 0.0
    %1246 = vmatpush1.msra.mxu0 0.0
    %1247 = vmatprep.subr.mxu0 0.0
    %1248 = vmatpush1.msra.mxu0 0.0
    %1249 = vmatprep.subr.mxu0 0.0
    %1250 = vmatpush1.msra.mxu0 0.0
    %1251 = vmatprep.subr.mxu0 0.0
    %1252 = vmatpush1.msra.mxu0 0.0
    %1253 = vmatprep.subr.mxu0 0.0
    %1254 = vmatpush1.msra.mxu0 0.0
    %1255 = vmatprep.mubr.f32.mxu0 0.0
    %1256 = vmatmul.mubr.f32.gmra.mrb[0].mxu0 %v1189
    %v1257 = vpop.f32.mrb[0].mxu0
    %v1258 = vadd.f32 %v1186, %v1257
    %v1259 = vpop.f32.mrb[0].mxu0
    %v1260 = vadd.f32 %v1186, %v1259
    %1261 = vdwg.mxu0
    %1262 = vmatprep.subr.mxu0 %v1182
    %1263 = vmatpush1.msra.mxu0 %v1181
    %1264 = vmatprep.subr.mxu0 0.0
    %1265 = vmatpush1.msra.mxu0 0.0
    %1266 = vmatprep.subr.mxu0 0.0
    %1267 = vmatpush1.msra.mxu0 0.0
    %1268 = vmatprep.subr.mxu0 0.0
    %1269 = vmatpush1.msra.mxu0 0.0
    %1270 = vmatprep.subr.mxu0 0.0
    %1271 = vmatpush1.msra.mxu0 0.0
    %1272 = vmatprep.subr.mxu0 0.0
    %1273 = vmatpush1.msra.mxu0 0.0
    %1274 = vmatprep.subr.mxu0 0.0
    %1275 = vmatpush1.msra.mxu0 0.0
    %1276 = vmatprep.subr.mxu0 0.0
    %1277 = vmatpush1.msra.mxu0 0.0
    %1278 = vmatprep.subr.mxu0 0.0
    %1279 = vmatpush1.msra.mxu0 0.0
    %1280 = vmatprep.subr.mxu0 0.0
    %1281 = vmatpush1.msra.mxu0 0.0
    %1282 = vmatprep.subr.mxu0 0.0
    %1283 = vmatpush1.msra.mxu0 0.0
    %1284 = vmatprep.subr.mxu0 0.0
    %1285 = vmatpush1.msra.mxu0 0.0
    %1286 = vmatprep.subr.mxu0 0.0
    %1287 = vmatpush1.msra.mxu0 0.0
    %1288 = vmatprep.subr.mxu0 0.0
    %1289 = vmatpush1.msra.mxu0 0.0
    %1290 = vmatprep.subr.mxu0 0.0
    %1291 = vmatpush1.msra.mxu0 0.0
    %1292 = vmatprep.subr.mxu0 0.0
    %1293 = vmatpush1.msra.mxu0 0.0
    %1294 = vmatprep.subr.mxu0 0.0
    %1295 = vmatpush1.msra.mxu0 0.0
    %1296 = vmatprep.subr.mxu0 0.0
    %1297 = vmatpush1.msra.mxu0 0.0
    %1298 = vmatprep.subr.mxu0 0.0
    %1299 = vmatpush1.msra.mxu0 0.0
    %1300 = vmatprep.subr.mxu0 0.0
    %1301 = vmatpush1.msra.mxu0 0.0
    %1302 = vmatprep.subr.mxu0 0.0
    %1303 = vmatpush1.msra.mxu0 0.0
    %1304 = vmatprep.subr.mxu0 0.0
    %1305 = vmatpush1.msra.mxu0 0.0
    %1306 = vmatprep.subr.mxu0 0.0
    %1307 = vmatpush1.msra.mxu0 0.0
    %1308 = vmatprep.subr.mxu0 0.0
    %1309 = vmatpush1.msra.mxu0 0.0
    %1310 = vmatprep.subr.mxu0 0.0
    %1311 = vmatpush1.msra.mxu0 0.0
    %1312 = vmatprep.subr.mxu0 0.0
    %1313 = vmatpush1.msra.mxu0 0.0
    %1314 = vmatprep.subr.mxu0 0.0
    %1315 = vmatpush1.msra.mxu0 0.0
    %1316 = vmatprep.subr.mxu0 0.0
    %1317 = vmatpush1.msra.mxu0 0.0
    %1318 = vmatprep.subr.mxu0 0.0
    %1319 = vmatpush1.msra.mxu0 0.0
    %1320 = vmatprep.subr.mxu0 0.0
    %1321 = vmatpush1.msra.mxu0 0.0
    %1322 = vmatprep.subr.mxu0 0.0
    %1323 = vmatpush1.msra.mxu0 0.0
    %1324 = vmatprep.subr.mxu0 0.0
    %1325 = vmatpush1.msra.mxu0 0.0
    %1326 = vmatprep.mubr.f32.mxu0 0.0
    %1327 = vmatmul.mubr.f32.gmra.mrb[0].mxu0 %v1189
    %v1328 = vpop.f32.mrb[0].mxu0
    %v1329 = vadd.f32 %v1186, %v1328
    %v1330 = vpop.f32.mrb[0].mxu0
    %v1331 = vadd.f32 %v1186, %v1330
    %1332 = vdwg.mxu0
    %v1337 = vcombine.low %v1258, %v1260
    %v1338 = vcombine.low %v1329, %v1331
    %v1340 = vunpack.c.l.s4 1983009808
    %v1341 = vunpack.c.0.s8 %v1340
    %v1342 = vlaneseq
    %v1343 = vshrl.u32 %v1342, 7
    %v1344 = vsub.s32 %v1341, %v1343
    %v1345 = vrot.slane %v1337, %v1344
    %v1347 = vunpack.c.l.s4 1983009808
    %v1348 = vunpack.c.0.s8 %v1347
    %v1349 = vlaneseq
    %v1350 = vshrl.u32 %v1349, 7
    %v1351 = vsub.s32 %v1348, %v1350
    %v1352 = vrot.slane %v1338, %v1351
    %v1353 = vcombine.low %v1345, %v1352
    %1355 = vst [vmem:[#allocation4] sm:$0xff] %v1353
    %v1356 = vsub.f32 %v66, %v1258
    %v1357 = vsub.f32 %v67, %v1260
    %v1358 = vsub.f32 %v68, %v1329
    %v1359 = vsub.f32 %v69, %v1331
    %v1360 = vmul.f32 %v1356, -0.5
    %v1361 = vmul.f32 %v1357, -0.5
    %v1362 = vmul.f32 %v1358, -0.5
    %v1363 = vmul.f32 %v1359, -0.5
    %v1364 = vmul.f32 %v1360, %v1356
    %v1365 = vmul.f32 %v1361, %v1357
    %v1366 = vmul.f32 %v1362, %v1358
    %v1367 = vmul.f32 %v1363, %v1359
    %v1368 = vld [vmem:[#allocation2] sm:$0xff]
    %v1373 = vcombine.low %v664, %v665
    %v1374 = vcombine.low %v666, %v667
    %v1376 = vunpack.c.l.s4 1983009808
    %v1377 = vunpack.c.0.s8 %v1376
    %v1378 = vlaneseq
    %v1379 = vshrl.u32 %v1378, 7
    %v1380 = vsub.s32 %v1377, %v1379
    %v1381 = vrot.slane %v1373, %v1380
    %v1383 = vunpack.c.l.s4 1983009808
    %v1384 = vunpack.c.0.s8 %v1383
    %v1385 = vlaneseq
    %v1386 = vshrl.u32 %v1385, 7
    %v1387 = vsub.s32 %v1384, %v1386
    %v1388 = vrot.slane %v1374, %v1387
    %v1389 = vcombine.low %v1381, %v1388
    %v1391 = vadd.f32 %v1368, %v1389
    %1392 = vst [vmem:[#allocation2] sm:$0xff] %v1391
    %v1393 = vld [vmem:[#allocation3] sm:$0xff]
    %v1398 = vcombine.low %v1364, %v1365
    %v1399 = vcombine.low %v1366, %v1367
    %v1401 = vunpack.c.l.s4 1983009808
    %v1402 = vunpack.c.0.s8 %v1401
    %v1403 = vlaneseq
    %v1404 = vshrl.u32 %v1403, 7
    %v1405 = vsub.s32 %v1402, %v1404
    %v1406 = vrot.slane %v1398, %v1405
    %v1408 = vunpack.c.l.s4 1983009808
    %v1409 = vunpack.c.0.s8 %v1408
    %v1410 = vlaneseq
    %v1411 = vshrl.u32 %v1410, 7
    %v1412 = vsub.s32 %v1409, %v1411
    %v1413 = vrot.slane %v1399, %v1412
    %v1414 = vcombine.low %v1406, %v1413
    %v1416 = vadd.f32 %v1393, %v1414
    %1417 = vst [vmem:[#allocation3] sm:$0xff] %v1416
    // Predicated region
    $region18: #{cvae_forward.1} parent=1 // pred_check
      %p1418 = pneg %p43
    $region19: #{cvae_forward.1} parent=1 // pred_check_branch
      %1420 = sbr.rel (%p1418) target = $region21
    $region20: #{cvae_forward.1} parent=1 // pred_region
      %v1421 = vld [vmem:[#allocation2] sm:$0xff]
      %v1423 = vcombine.high %v1421, %v1421
      %v1425 = vunpack.c.l.s4 1983009808
      %v1426 = vunpack.c.0.s8 %v1425
      %v1427 = vlaneseq
      %v1428 = vshrl.u32 %v1427, 7
      %v1429 = vsub.s32 %v1426, %v1428
      %v1430 = vrot.slane %v1421, %v1429
      %v1432 = vunpack.c.l.s4 1983009808
      %v1433 = vunpack.c.0.s8 %v1432
      %v1434 = vlaneseq
      %v1435 = vshrl.u32 %v1434, 7
      %v1436 = vsub.s32 %v1433, %v1435
      %v1437 = vrot.slane %v1423, %v1436
      %v1438 = vcombine.high %v1430, %v1430
      %v1439 = vcombine.high %v1437, %v1437
      %v1444 = vsel %vm713, %v1430, 0.0
      %v1445 = vsel %vm713, %v1438, 0.0
      %v1446 = vadd.f32 %v1444, %v1445
      %v1447 = vsel %vm713, %v1437, 0.0
      %v1448 = vadd.f32 %v1446, %v1447
      %v1449 = vsel %vm713, %v1439, 0.0
      %v1450 = vadd.f32 %v1448, %v1449
      %1451 = vadd.xlane.f32.xlu0 %v1450
      %v1452 = vpop.xlane.xlu0 %1451
      %v1453 = vrot.slane %v1452, 4
      %v1454 = vadd.f32 %v1452, %v1453
      %v1455 = vrot.slane %v1454, 2
      %v1456 = vadd.f32 %v1454, %v1455
      %v1457 = vrot.slane %v1456, 1
      %v1458 = vadd.f32 %v1456, %v1457
      %s1459 = vtos %v1458
      %v1460 = vstv %s1459
      %vm1461 = vcmask 0
      %1462 = vst.msk [vmem:[#allocation6] sm:$0x1] %vm1461, %v1460
      %v1463 = vld [vmem:[#allocation3] sm:$0xff]
      %v1465 = vcombine.high %v1463, %v1463
      %v1467 = vunpack.c.l.s4 1983009808
      %v1468 = vunpack.c.0.s8 %v1467
      %v1469 = vlaneseq
      %v1470 = vshrl.u32 %v1469, 7
      %v1471 = vsub.s32 %v1468, %v1470
      %v1472 = vrot.slane %v1463, %v1471
      %v1474 = vunpack.c.l.s4 1983009808
      %v1475 = vunpack.c.0.s8 %v1474
      %v1476 = vlaneseq
      %v1477 = vshrl.u32 %v1476, 7
      %v1478 = vsub.s32 %v1475, %v1477
      %v1479 = vrot.slane %v1465, %v1478
      %v1480 = vcombine.high %v1472, %v1472
      %v1481 = vcombine.high %v1479, %v1479
      %v1486 = vsel %vm713, %v1472, 0.0
      %v1487 = vsel %vm713, %v1480, 0.0
      %v1488 = vadd.f32 %v1486, %v1487
      %v1489 = vsel %vm713, %v1479, 0.0
      %v1490 = vadd.f32 %v1488, %v1489
      %v1491 = vsel %vm713, %v1481, 0.0
      %v1492 = vadd.f32 %v1490, %v1491
      %1493 = vadd.xlane.f32.xlu0 %v1492
      %v1494 = vpop.xlane.xlu0 %1493
      %vm1495 = vcmask 1024
      %1496 = vst.msk [vmem:[%s4] sm:$0x3] %vm1495, %v1494
    $region21: #{cvae_forward.1} parent=1 // pred_fallthru
      _
    // Predicated region
    $region22: #{cvae_forward.1} parent=1 // pred_check
      _
    $region23: #{cvae_forward.1} parent=1 // pred_check_branch
      %1498 = sbr.rel (0) target = $region25
    $region24: #{cvae_forward.1} parent=1 // pred_region
      %s1499 = sadd.s32 0, 0
      %s1500 = smul.u32 4, %s1499
      %s1502 = ssub.s32 128, 128
      %1503 = vsyncadd [#allocation5], %s1502
      %s1504 = smul.addr %s1500, 32
      %s1505 = scalar_lea.hbm %s3, %s1504
      %s1507 = sshll.u32 [#allocation4], 4
      %s1508 = int_to_ptr.vmem [resolvable:$true] %s1507
      %1510 = dma.vmem_to_hbm [thread:$0]  %s1508, 128, %s1505, [#allocation5]
    $region25: #{cvae_forward.1} parent=1 // pred_fallthru
      _
    // Predicated region
    $region26: #{cvae_forward.1} parent=1 // pred_check
      _
    $region27: #{cvae_forward.1} parent=1 // pred_check_branch
      %1512 = sbr.rel (0) target = $region29
    $region28: #{cvae_forward.1} parent=1 // pred_region
      _
    $region29: #{cvae_forward.1} parent=1 // pred_fallthru
      _
    // Predicated region
    $region30: #{cvae_forward.1} parent=1 // pred_check
      _
    $region31: #{cvae_forward.1} parent=1 // pred_check_branch
      %1514 = sbr.rel (0) target = $region33
    $region32: #{cvae_forward.1} parent=1 // pred_region
      %s1516 = ssub.s32 16, 16
      %1517 = vsyncadd [#allocation7], %s1516
      %s1519 = sshll.u32 [#allocation6], 4
      %s1520 = int_to_ptr.vmem [resolvable:$true] %s1519
      %1522 = dma.vmem_to_hbm [thread:$0]  %s1520, 16, %s5, [#allocation7]
    $region33: #{cvae_forward.1} parent=1 // pred_fallthru
      _
    // Predicated region
    $region34: #{cvae_forward.1} parent=1 // pred_check
      _
    $region35: #{cvae_forward.1} parent=1 // pred_check_branch
      %1524 = sbr.rel (0) target = $region37
    $region36: #{cvae_forward.1} parent=1 // pred_region
      %1525 = dma.done [#allocation5], 128
    $region37: #{cvae_forward.1} parent=1 // pred_fallthru
      _
    // Predicated region
    $region38: #{cvae_forward.1} parent=1 // pred_check
      _
    $region39: #{cvae_forward.1} parent=1 // pred_check_branch
      %1527 = sbr.rel (0) target = $region41
    $region40: #{cvae_forward.1} parent=1 // pred_region
      _
    $region41: #{cvae_forward.1} parent=1 // pred_fallthru
      _
    // Predicated region
    $region42: #{cvae_forward.1} parent=1 // pred_check
      _
    $region43: #{cvae_forward.1} parent=1 // pred_check_branch
      %1529 = sbr.rel (0) target = $region45
    $region44: #{cvae_forward.1} parent=1 // pred_region
      %1530 = dma.done [#allocation7], 16
    $region45: #{cvae_forward.1} parent=1 // pred_fallthru
      _
    %1531 = vsyncpa [#allocation5], 1
    %1532 = vsyncpa [#allocation7], 1

</llo_original>
